<compile_context>
chip_gen: v7x
topology: tpu7x:2x2x1
jax: 0.10.0
libtpu: 0.0.40
codegen_flags: <defaults>
</compile_context>

<pallas_src>
import math

import jax
import jax.numpy as jnp
from jax.experimental import pallas as pl
from jax.experimental.pallas import tpu as pltpu

# ---- model config (small, deterministic) -----------------------------------
B, L, D = 2, 16, 32          # batch, seq_len, d_model
H = 4                        # n_heads
DH = D // H                  # head dim
DFF = 64                     # d_ff
MOVING_AVG = 5               # series_decomp kernel size (odd)
N_LAYERS = 2
EPS = 1e-5                   # nn.LayerNorm default eps

MATMUL_DTYPE = jnp.bfloat16  # MXU-native operands, f32 accumulation
                             # (use jnp.float32 for exact parity with PyTorch)

# lane-dense packing of the (L, D) output: RPC rows share one 128-lane row.
RPC = 128 // D               # rows per packed output row      (= 4)
NCH = L // RPC               # number of D-wide lane chunks    (= 4)
ATTN_W = N_LAYERS * H * L    # packed attention last dim       (= 128)


# ---- in-kernel helpers ------------------------------------------------------
def _mm(a, b):
    """a @ b on the MXU (bf16 operands, f32 accumulation)."""
    return jax.lax.dot_general(
        a.astype(MATMUL_DTYPE), b.astype(MATMUL_DTYPE),
        dimension_numbers=(((a.ndim - 1,), (0,)), ((), ())),
        preferred_element_type=jnp.float32)


def _mm_nt(a, b):
    """a @ b.T (contract last dims) without materializing a transpose."""
    return jax.lax.dot_general(
        a.astype(MATMUL_DTYPE), b.astype(MATMUL_DTYPE),
        dimension_numbers=(((1,), (1,)), ((), ())),
        preferred_element_type=jnp.float32)


def _moving_avg(x):
    """series_decomp moving mean: replicate-pad (k-1)//2 each side, mean of k.

    Implemented with pltpu.roll (XLU) + iota/where edge correction instead of
    concatenate + shifted slices; multiply by 1/k instead of dividing.
    """
    p = (MOVING_AVG - 1) // 2
    row = jax.lax.broadcasted_iota(jnp.int32, x.shape, 0)
    first = jnp.broadcast_to(x[0:1, :], x.shape)
    last = jnp.broadcast_to(x[L - 1:L, :], x.shape)
    acc = x
    for s in range(1, p + 1):                        # static unroll (p = 2)
        down = pltpu.roll(x, shift=s, axis=0)        # down[i] = x[i - s]
        down = jnp.where(row < s, first, down)       # replicate top edge
        up = pltpu.roll(x, shift=L - s, axis=0)      # up[i]   = x[i + s]
        up = jnp.where(row >= L - s, last, up)       # replicate bottom edge
        acc = acc + down + up
    return acc * (1.0 / MOVING_AVG)


# ---- fused Encoder kernel: 2x EncoderLayer + my_Layernorm -------------------
def encoder_kernel(x_ref, wqkv_ref, bqkv_ref, wo_ref, bo_ref,
                   wc1_ref, wc2_ref, gamma_ref, beta_ref,
                   out_ref, attn_ref):
    x = x_ref[0]                                     # (L, D) f32
    attn_pieces = []

    for layer in range(N_LAYERS):                    # static unroll over layers
        # ---- AttentionLayer(FullAttention): fused QKV projection ----------
        qkv = _mm(x, wqkv_ref[layer]) + bqkv_ref[layer]        # (L, 3D)
        q = qkv[:, 0:D]                  # 1/sqrt(DH) already folded into Wq/bq
        k = qkv[:, D:2 * D]
        v = qkv[:, 2 * D:3 * D]

        head_outs = []
        for h in range(H):                           # static unroll over heads
            qh = q[:, h * DH:(h + 1) * DH]           # (L, DH)
            kh = k[:, h * DH:(h + 1) * DH]
            vh = v[:, h * DH:(h + 1) * DH]
            s = _mm_nt(qh, kh)                                  # (L, L)
            s = s - jnp.max(s, axis=-1, keepdims=True)
            e = jnp.exp(s)
            a = e * pl.reciprocal(jnp.sum(e, axis=-1, keepdims=True),
                                  approx=True)                  # softmax
            attn_pieces.append(a)
            head_outs.append(_mm(a, vh))                        # (L, DH)

        attn_out = (_mm(jnp.concatenate(head_outs, axis=-1), wo_ref[layer])
                    + bo_ref[layer])                            # (L, D)

        # ---- x = x + dropout(new_x); decomp1 -------------------------------
        x1 = x + attn_out
        res = x1 - _moving_avg(x1)

        # ---- FFN (Conv1d k=1, bias=False) + decomp2 ------------------------
        y = _mm(jnp.maximum(_mm(res, wc1_ref[layer]), 0.0), wc2_ref[layer])
        x2 = res + y
        x = x2 - _moving_avg(x2)

    # ---- my_Layernorm: LayerNorm(D) then subtract seq-mean ------------------
    mu = jnp.mean(x, axis=-1, keepdims=True)
    var = jnp.mean((x - mu) ** 2, axis=-1, keepdims=True)
    x_hat = (x - mu) * jax.lax.rsqrt(var + EPS) * gamma_ref[...] + beta_ref[...]
    x_hat = x_hat - jnp.mean(x_hat, axis=0, keepdims=True)

    # ---- lane-dense stores (128-wide last dim -> unmasked vst) --------------
    out_ref[0] = jnp.concatenate(
        [x_hat[RPC * j:RPC * (j + 1), :] for j in range(NCH)], axis=-1)
    attn_ref[0] = jnp.concatenate(attn_pieces, axis=-1)


# ---- host-side wrapper ------------------------------------------------------
def _pack_params(layer_params):
    """Stack per-layer weights; merge QKV; fold 1/sqrt(DH) into Wq/bq."""
    scale = 1.0 / math.sqrt(DH)
    wqkv = jnp.stack([jnp.concatenate(
        [p["wq"] * scale, p["wk"], p["wv"]], axis=1) for p in layer_params])
    bqkv = jnp.stack([jnp.concatenate(
        [p["bq"] * scale, p["bk"], p["bv"]], axis=1) for p in layer_params])
    wo = jnp.stack([p["wo"] for p in layer_params])
    bo = jnp.stack([p["bo"] for p in layer_params])
    wc1 = jnp.stack([p["wc1"] for p in layer_params])
    wc2 = jnp.stack([p["wc2"] for p in layer_params])
    return wqkv, bqkv, wo, bo, wc1, wc2


@jax.jit
def encoder_forward(x, layer_params, gamma, beta):
    """Autoformer Encoder.forward (conv_layers=None): returns (x, attns)."""
    wqkv, bqkv, wo, bo, wc1, wc2 = _pack_params(layer_params)

    def full(arr):   # whole (small) array resident across the grid
        return pl.BlockSpec(arr.shape, lambda b: (0,) * arr.ndim)

    out_packed, attn_packed = pl.pallas_call(
        encoder_kernel,
        grid=(B,),
        in_specs=[
            pl.BlockSpec((1, L, D), lambda b: (b, 0, 0)),
            full(wqkv), full(bqkv), full(wo), full(bo),
            full(wc1), full(wc2), full(gamma), full(beta),
        ],
        out_specs=[
            pl.BlockSpec((1, RPC, NCH * D), lambda b: (b, 0, 0)),
            pl.BlockSpec((1, L, ATTN_W), lambda b: (b, 0, 0)),
        ],
        out_shape=[
            jax.ShapeDtypeStruct((B, RPC, NCH * D), jnp.float32),
            jax.ShapeDtypeStruct((B, L, ATTN_W), jnp.float32),
        ],
        compiler_params=pltpu.CompilerParams(
            dimension_semantics=("parallel",)),      # v7x: one TC per batch elt
    )(x, wqkv, bqkv, wo, bo, wc1, wc2, gamma, beta)

    # Undo the lane-dense packing (host-side layout plumbing only).
    out = (out_packed.reshape(B, RPC, NCH, D)
           .transpose(0, 2, 1, 3).reshape(B, L, D))
    attn_all = (attn_packed.reshape(B, L, N_LAYERS, H, L)
                .transpose(2, 0, 3, 1, 4))           # (N_LAYERS, B, H, L, L)
    attns = [attn_all[i] for i in range(N_LAYERS)]
    return out, attns


# ---- deterministic parameter init -------------------------------------------
def init_params(key):
    layer_params = []
    for _ in range(N_LAYERS):
        ks = jax.random.split(key, 8)
        key = ks[-1]
        s = 1.0 / math.sqrt(D)
        p = {
            "wq": jax.random.normal(ks[0], (D, D), jnp.float32) * s,
            "bq": jnp.zeros((1, D), jnp.float32),
            "wk": jax.random.normal(ks[1], (D, D), jnp.float32) * s,
            "bk": jnp.zeros((1, D), jnp.float32),
            "wv": jax.random.normal(ks[2], (D, D), jnp.float32) * s,
            "bv": jnp.zeros((1, D), jnp.float32),
            "wo": jax.random.normal(ks[3], (D, D), jnp.float32) * s,
            "bo": jnp.zeros((1, D), jnp.float32),
            "wc1": jax.random.normal(ks[4], (D, DFF), jnp.float32) * s,
            "wc2": jax.random.normal(ks[5], (DFF, D), jnp.float32) / math.sqrt(DFF),
        }
        layer_params.append(p)
    gamma = jnp.ones((1, D), jnp.float32)
    beta = jnp.zeros((1, D), jnp.float32)
    return layer_params, gamma, beta


if __name__ == "__main__":
    key = jax.random.PRNGKey(0)
    k_x, k_p = jax.random.split(key)
    x = jax.random.normal(k_x, (B, L, D), jnp.float32)
    layer_params, gamma, beta = init_params(k_p)

    out, attns = encoder_forward(x, layer_params, gamma, beta)
    jax.block_until_ready(out)
    for a in attns:
        jax.block_until_ready(a)

    assert out.shape == (B, L, D)
    assert len(attns) == N_LAYERS
    assert all(a.shape == (B, H, L, L) for a in attns)
    assert bool(jnp.all(jnp.isfinite(out)))
    print("KERNEL_OK")
</pallas_src>

<mosaic_0001>
module attributes {stable_mosaic.version = 11 : i64} {
  func.func @encoder_kernel(%arg0: i32, %arg1: memref<1x16x32xf32, #tpu.memory_space<vmem>>, %arg2: memref<2x32x96xf32, #tpu.memory_space<vmem>>, %arg3: memref<2x1x96xf32, #tpu.memory_space<vmem>>, %arg4: memref<2x32x32xf32, #tpu.memory_space<vmem>>, %arg5: memref<2x1x32xf32, #tpu.memory_space<vmem>>, %arg6: memref<2x32x64xf32, #tpu.memory_space<vmem>>, %arg7: memref<2x64x32xf32, #tpu.memory_space<vmem>>, %arg8: memref<1x32xf32, #tpu.memory_space<vmem>>, %arg9: memref<1x32xf32, #tpu.memory_space<vmem>>, %arg10: memref<1x4x128xf32, #tpu.memory_space<vmem>>, %arg11: memref<1x16x128xf32, #tpu.memory_space<vmem>>) attributes {dimension_semantics = [#tpu.dimension_semantics<parallel>], iteration_bounds = array<i64: 2>, scalar_prefetch = 0 : i64, scratch_operands = 0 : i64, tpu.core_type = #tpu.core_type<tc>, window_params = [{transform_indices = @transform_0, window_bounds = array<i64: 1, 16, 32>}, {pipeline_mode = #tpu.pipeline_mode<synchronous>, transform_indices = @transform_1, window_bounds = array<i64: 2, 32, 96>}, {pipeline_mode = #tpu.pipeline_mode<synchronous>, transform_indices = @transform_2, window_bounds = array<i64: 2, 1, 96>}, {pipeline_mode = #tpu.pipeline_mode<synchronous>, transform_indices = @transform_3, window_bounds = array<i64: 2, 32, 32>}, {pipeline_mode = #tpu.pipeline_mode<synchronous>, transform_indices = @transform_4, window_bounds = array<i64: 2, 1, 32>}, {pipeline_mode = #tpu.pipeline_mode<synchronous>, transform_indices = @transform_5, window_bounds = array<i64: 2, 32, 64>}, {pipeline_mode = #tpu.pipeline_mode<synchronous>, transform_indices = @transform_6, window_bounds = array<i64: 2, 64, 32>}, {pipeline_mode = #tpu.pipeline_mode<synchronous>, transform_indices = @transform_7, window_bounds = array<i64: 1, 32>}, {pipeline_mode = #tpu.pipeline_mode<synchronous>, transform_indices = @transform_8, window_bounds = array<i64: 1, 32>}, {transform_indices = @transform_9, window_bounds = array<i64: 1, 4, 128>}, {transform_indices = @transform_10, window_bounds = array<i64: 1, 16, 128>}]} {
    %c0 = arith.constant 0 : index
    %c0_0 = arith.constant 0 : index
    %c0_1 = arith.constant 0 : index
    %0 = vector.load %arg1[%c0, %c0_0, %c0_1] : memref<1x16x32xf32, #tpu.memory_space<vmem>>, vector<1x16x32xf32>
    %1 = vector.shape_cast %0 : vector<1x16x32xf32> to vector<16x32xf32>
    %c0_2 = arith.constant 0 : index
    %c0_3 = arith.constant 0 : index
    %c0_4 = arith.constant 0 : index
    %2 = vector.load %arg2[%c0_2, %c0_3, %c0_4] : memref<2x32x96xf32, #tpu.memory_space<vmem>>, vector<1x32x96xf32>
    %3 = vector.shape_cast %2 : vector<1x32x96xf32> to vector<32x96xf32>
    %4 = arith.truncf %1 : vector<16x32xf32> to vector<16x32xbf16>
    %5 = arith.truncf %3 : vector<32x96xf32> to vector<32x96xbf16>
    %cst = arith.constant dense<0.000000e+00> : vector<16x96xf32>
    %6 = tpu.matmul %4, %5, %cst {dimension_numbers = #tpu.dot_dimension_numbers<[1], [0], [0], [1], [0, 0, 1, 1], [], []>} : vector<16x32xbf16>, vector<32x96xbf16>, vector<16x96xf32> -> vector<16x96xf32>
    %c0_5 = arith.constant 0 : index
    %c0_6 = arith.constant 0 : index
    %c0_7 = arith.constant 0 : index
    %7 = vector.load %arg3[%c0_5, %c0_6, %c0_7] : memref<2x1x96xf32, #tpu.memory_space<vmem>>, vector<1x1x96xf32>
    %8 = vector.shape_cast %7 : vector<1x1x96xf32> to vector<1x96xf32>
    %9 = vector.broadcast %8 : vector<1x96xf32> to vector<16x96xf32>
    %10 = arith.addf %6, %9 : vector<16x96xf32>
    %11 = vector.extract_strided_slice %10 {offsets = [0, 0], sizes = [16, 32], strides = [1, 1]} : vector<16x96xf32> to vector<16x32xf32>
    %12 = vector.extract_strided_slice %10 {offsets = [0, 32], sizes = [16, 32], strides = [1, 1]} : vector<16x96xf32> to vector<16x32xf32>
    %13 = vector.extract_strided_slice %10 {offsets = [0, 64], sizes = [16, 32], strides = [1, 1]} : vector<16x96xf32> to vector<16x32xf32>
    %14 = vector.extract_strided_slice %11 {offsets = [0, 0], sizes = [16, 8], strides = [1, 1]} : vector<16x32xf32> to vector<16x8xf32>
    %15 = vector.extract_strided_slice %12 {offsets = [0, 0], sizes = [16, 8], strides = [1, 1]} : vector<16x32xf32> to vector<16x8xf32>
    %16 = vector.extract_strided_slice %13 {offsets = [0, 0], sizes = [16, 8], strides = [1, 1]} : vector<16x32xf32> to vector<16x8xf32>
    %17 = arith.truncf %14 : vector<16x8xf32> to vector<16x8xbf16>
    %18 = arith.truncf %15 : vector<16x8xf32> to vector<16x8xbf16>
    %cst_8 = arith.constant dense<0.000000e+00> : vector<16x16xf32>
    %19 = tpu.matmul %17, %18, %cst_8 {dimension_numbers = #tpu.dot_dimension_numbers<[1], [1], [0], [0], [0, 0, 1, 0], [], []>} : vector<16x8xbf16>, vector<16x8xbf16>, vector<16x16xf32> -> vector<16x16xf32>
    %cst_9 = arith.constant dense<0xFF800000> : vector<16xf32>
    %20 = vector.multi_reduction <maximumf>, %19, %cst_9 [1] : vector<16x16xf32> to vector<16xf32>
    %21 = vector.shape_cast %20 : vector<16xf32> to vector<16x1xf32>
    %22 = vector.broadcast %21 : vector<16x1xf32> to vector<16x16xf32>
    %23 = arith.subf %19, %22 : vector<16x16xf32>
    %24 = math.exp %23 : vector<16x16xf32>
    %cst_10 = arith.constant dense<0.000000e+00> : vector<16xf32>
    %25 = vector.multi_reduction <add>, %24, %cst_10 [1] : vector<16x16xf32> to vector<16xf32>
    %26 = vector.shape_cast %25 : vector<16xf32> to vector<16x1xf32>
    %27 = tpu.reciprocal %26 {approx = true} : vector<16x1xf32> -> vector<16x1xf32>
    %28 = vector.broadcast %27 : vector<16x1xf32> to vector<16x16xf32>
    %29 = arith.mulf %24, %28 : vector<16x16xf32>
    %30 = arith.truncf %29 : vector<16x16xf32> to vector<16x16xbf16>
    %31 = arith.truncf %16 : vector<16x8xf32> to vector<16x8xbf16>
    %cst_11 = arith.constant dense<0.000000e+00> : vector<16x8xf32>
    %32 = tpu.matmul %30, %31, %cst_11 {dimension_numbers = #tpu.dot_dimension_numbers<[1], [0], [0], [1], [0, 0, 1, 1], [], []>} : vector<16x16xbf16>, vector<16x8xbf16>, vector<16x8xf32> -> vector<16x8xf32>
    %33 = vector.extract_strided_slice %11 {offsets = [0, 8], sizes = [16, 8], strides = [1, 1]} : vector<16x32xf32> to vector<16x8xf32>
    %34 = vector.extract_strided_slice %12 {offsets = [0, 8], sizes = [16, 8], strides = [1, 1]} : vector<16x32xf32> to vector<16x8xf32>
    %35 = vector.extract_strided_slice %13 {offsets = [0, 8], sizes = [16, 8], strides = [1, 1]} : vector<16x32xf32> to vector<16x8xf32>
    %36 = arith.truncf %33 : vector<16x8xf32> to vector<16x8xbf16>
    %37 = arith.truncf %34 : vector<16x8xf32> to vector<16x8xbf16>
    %cst_12 = arith.constant dense<0.000000e+00> : vector<16x16xf32>
    %38 = tpu.matmul %36, %37, %cst_12 {dimension_numbers = #tpu.dot_dimension_numbers<[1], [1], [0], [0], [0, 0, 1, 0], [], []>} : vector<16x8xbf16>, vector<16x8xbf16>, vector<16x16xf32> -> vector<16x16xf32>
    %cst_13 = arith.constant dense<0xFF800000> : vector<16xf32>
    %39 = vector.multi_reduction <maximumf>, %38, %cst_13 [1] : vector<16x16xf32> to vector<16xf32>
    %40 = vector.shape_cast %39 : vector<16xf32> to vector<16x1xf32>
    %41 = vector.broadcast %40 : vector<16x1xf32> to vector<16x16xf32>
    %42 = arith.subf %38, %41 : vector<16x16xf32>
    %43 = math.exp %42 : vector<16x16xf32>
    %cst_14 = arith.constant dense<0.000000e+00> : vector<16xf32>
    %44 = vector.multi_reduction <add>, %43, %cst_14 [1] : vector<16x16xf32> to vector<16xf32>
    %45 = vector.shape_cast %44 : vector<16xf32> to vector<16x1xf32>
    %46 = tpu.reciprocal %45 {approx = true} : vector<16x1xf32> -> vector<16x1xf32>
    %47 = vector.broadcast %46 : vector<16x1xf32> to vector<16x16xf32>
    %48 = arith.mulf %43, %47 : vector<16x16xf32>
    %49 = arith.truncf %48 : vector<16x16xf32> to vector<16x16xbf16>
    %50 = arith.truncf %35 : vector<16x8xf32> to vector<16x8xbf16>
    %cst_15 = arith.constant dense<0.000000e+00> : vector<16x8xf32>
    %51 = tpu.matmul %49, %50, %cst_15 {dimension_numbers = #tpu.dot_dimension_numbers<[1], [0], [0], [1], [0, 0, 1, 1], [], []>} : vector<16x16xbf16>, vector<16x8xbf16>, vector<16x8xf32> -> vector<16x8xf32>
    %52 = vector.extract_strided_slice %11 {offsets = [0, 16], sizes = [16, 8], strides = [1, 1]} : vector<16x32xf32> to vector<16x8xf32>
    %53 = vector.extract_strided_slice %12 {offsets = [0, 16], sizes = [16, 8], strides = [1, 1]} : vector<16x32xf32> to vector<16x8xf32>
    %54 = vector.extract_strided_slice %13 {offsets = [0, 16], sizes = [16, 8], strides = [1, 1]} : vector<16x32xf32> to vector<16x8xf32>
    %55 = arith.truncf %52 : vector<16x8xf32> to vector<16x8xbf16>
    %56 = arith.truncf %53 : vector<16x8xf32> to vector<16x8xbf16>
    %cst_16 = arith.constant dense<0.000000e+00> : vector<16x16xf32>
    %57 = tpu.matmul %55, %56, %cst_16 {dimension_numbers = #tpu.dot_dimension_numbers<[1], [1], [0], [0], [0, 0, 1, 0], [], []>} : vector<16x8xbf16>, vector<16x8xbf16>, vector<16x16xf32> -> vector<16x16xf32>
    %cst_17 = arith.constant dense<0xFF800000> : vector<16xf32>
    %58 = vector.multi_reduction <maximumf>, %57, %cst_17 [1] : vector<16x16xf32> to vector<16xf32>
    %59 = vector.shape_cast %58 : vector<16xf32> to vector<16x1xf32>
    %60 = vector.broadcast %59 : vector<16x1xf32> to vector<16x16xf32>
    %61 = arith.subf %57, %60 : vector<16x16xf32>
    %62 = math.exp %61 : vector<16x16xf32>
    %cst_18 = arith.constant dense<0.000000e+00> : vector<16xf32>
    %63 = vector.multi_reduction <add>, %62, %cst_18 [1] : vector<16x16xf32> to vector<16xf32>
    %64 = vector.shape_cast %63 : vector<16xf32> to vector<16x1xf32>
    %65 = tpu.reciprocal %64 {approx = true} : vector<16x1xf32> -> vector<16x1xf32>
    %66 = vector.broadcast %65 : vector<16x1xf32> to vector<16x16xf32>
    %67 = arith.mulf %62, %66 : vector<16x16xf32>
    %68 = arith.truncf %67 : vector<16x16xf32> to vector<16x16xbf16>
    %69 = arith.truncf %54 : vector<16x8xf32> to vector<16x8xbf16>
    %cst_19 = arith.constant dense<0.000000e+00> : vector<16x8xf32>
    %70 = tpu.matmul %68, %69, %cst_19 {dimension_numbers = #tpu.dot_dimension_numbers<[1], [0], [0], [1], [0, 0, 1, 1], [], []>} : vector<16x16xbf16>, vector<16x8xbf16>, vector<16x8xf32> -> vector<16x8xf32>
    %71 = vector.extract_strided_slice %11 {offsets = [0, 24], sizes = [16, 8], strides = [1, 1]} : vector<16x32xf32> to vector<16x8xf32>
    %72 = vector.extract_strided_slice %12 {offsets = [0, 24], sizes = [16, 8], strides = [1, 1]} : vector<16x32xf32> to vector<16x8xf32>
    %73 = vector.extract_strided_slice %13 {offsets = [0, 24], sizes = [16, 8], strides = [1, 1]} : vector<16x32xf32> to vector<16x8xf32>
    %74 = arith.truncf %71 : vector<16x8xf32> to vector<16x8xbf16>
    %75 = arith.truncf %72 : vector<16x8xf32> to vector<16x8xbf16>
    %cst_20 = arith.constant dense<0.000000e+00> : vector<16x16xf32>
    %76 = tpu.matmul %74, %75, %cst_20 {dimension_numbers = #tpu.dot_dimension_numbers<[1], [1], [0], [0], [0, 0, 1, 0], [], []>} : vector<16x8xbf16>, vector<16x8xbf16>, vector<16x16xf32> -> vector<16x16xf32>
    %cst_21 = arith.constant dense<0xFF800000> : vector<16xf32>
    %77 = vector.multi_reduction <maximumf>, %76, %cst_21 [1] : vector<16x16xf32> to vector<16xf32>
    %78 = vector.shape_cast %77 : vector<16xf32> to vector<16x1xf32>
    %79 = vector.broadcast %78 : vector<16x1xf32> to vector<16x16xf32>
    %80 = arith.subf %76, %79 : vector<16x16xf32>
    %81 = math.exp %80 : vector<16x16xf32>
    %cst_22 = arith.constant dense<0.000000e+00> : vector<16xf32>
    %82 = vector.multi_reduction <add>, %81, %cst_22 [1] : vector<16x16xf32> to vector<16xf32>
    %83 = vector.shape_cast %82 : vector<16xf32> to vector<16x1xf32>
    %84 = tpu.reciprocal %83 {approx = true} : vector<16x1xf32> -> vector<16x1xf32>
    %85 = vector.broadcast %84 : vector<16x1xf32> to vector<16x16xf32>
    %86 = arith.mulf %81, %85 : vector<16x16xf32>
    %87 = arith.truncf %86 : vector<16x16xf32> to vector<16x16xbf16>
    %88 = arith.truncf %73 : vector<16x8xf32> to vector<16x8xbf16>
    %cst_23 = arith.constant dense<0.000000e+00> : vector<16x8xf32>
    %89 = tpu.matmul %87, %88, %cst_23 {dimension_numbers = #tpu.dot_dimension_numbers<[1], [0], [0], [1], [0, 0, 1, 1], [], []>} : vector<16x16xbf16>, vector<16x8xbf16>, vector<16x8xf32> -> vector<16x8xf32>
    %90 = tpu.concatenate %32, %51, %70, %89 in 1 : vector<16x8xf32>, vector<16x8xf32>, vector<16x8xf32>, vector<16x8xf32> -> vector<16x32xf32>
    %c0_24 = arith.constant 0 : index
    %c0_25 = arith.constant 0 : index
    %c0_26 = arith.constant 0 : index
    %91 = vector.load %arg4[%c0_24, %c0_25, %c0_26] : memref<2x32x32xf32, #tpu.memory_space<vmem>>, vector<1x32x32xf32>
    %92 = vector.shape_cast %91 : vector<1x32x32xf32> to vector<32x32xf32>
    %93 = arith.truncf %90 : vector<16x32xf32> to vector<16x32xbf16>
    %94 = arith.truncf %92 : vector<32x32xf32> to vector<32x32xbf16>
    %cst_27 = arith.constant dense<0.000000e+00> : vector<16x32xf32>
    %95 = tpu.matmul %93, %94, %cst_27 {dimension_numbers = #tpu.dot_dimension_numbers<[1], [0], [0], [1], [0, 0, 1, 1], [], []>} : vector<16x32xbf16>, vector<32x32xbf16>, vector<16x32xf32> -> vector<16x32xf32>
    %c0_28 = arith.constant 0 : index
    %c0_29 = arith.constant 0 : index
    %c0_30 = arith.constant 0 : index
    %96 = vector.load %arg5[%c0_28, %c0_29, %c0_30] : memref<2x1x32xf32, #tpu.memory_space<vmem>>, vector<1x1x32xf32>
    %97 = vector.shape_cast %96 : vector<1x1x32xf32> to vector<1x32xf32>
    %98 = vector.broadcast %97 : vector<1x32xf32> to vector<16x32xf32>
    %99 = arith.addf %95, %98 : vector<16x32xf32>
    %100 = arith.addf %1, %99 : vector<16x32xf32>
    %101 = tpu.iota {dimensions = array<i32: 0>} : vector<16x32xi32>
    %102 = vector.extract_strided_slice %100 {offsets = [0, 0], sizes = [1, 32], strides = [1, 1]} : vector<16x32xf32> to vector<1x32xf32>
    %103 = vector.shape_cast %102 : vector<1x32xf32> to vector<1x32xf32>
    %104 = vector.broadcast %103 : vector<1x32xf32> to vector<16x32xf32>
    %105 = vector.extract_strided_slice %100 {offsets = [15, 0], sizes = [1, 32], strides = [1, 1]} : vector<16x32xf32> to vector<1x32xf32>
    %106 = vector.shape_cast %105 : vector<1x32xf32> to vector<1x32xf32>
    %107 = vector.broadcast %106 : vector<1x32xf32> to vector<16x32xf32>
    %c1_i32 = arith.constant 1 : i32
    %108 = tpu.dynamic_rotate %100 by %c1_i32 dim 0 : vector<16x32xf32>, i32 -> vector<16x32xf32>
    %c1_i32_31 = arith.constant 1 : i32
    %109 = vector.broadcast %c1_i32_31 : i32 to vector<16x32xi32>
    %110 = arith.cmpi slt, %101, %109 : vector<16x32xi32>
    %111 = arith.select %110, %104, %108 : vector<16x32xi1>, vector<16x32xf32>
    %c15_i32 = arith.constant 15 : i32
    %112 = tpu.dynamic_rotate %100 by %c15_i32 dim 0 : vector<16x32xf32>, i32 -> vector<16x32xf32>
    %c15_i32_32 = arith.constant 15 : i32
    %113 = vector.broadcast %c15_i32_32 : i32 to vector<16x32xi32>
    %114 = arith.cmpi sge, %101, %113 : vector<16x32xi32>
    %115 = arith.select %114, %107, %112 : vector<16x32xi1>, vector<16x32xf32>
    %116 = arith.addf %100, %111 : vector<16x32xf32>
    %117 = arith.addf %116, %115 : vector<16x32xf32>
    %c2_i32 = arith.constant 2 : i32
    %118 = tpu.dynamic_rotate %100 by %c2_i32 dim 0 : vector<16x32xf32>, i32 -> vector<16x32xf32>
    %c2_i32_33 = arith.constant 2 : i32
    %119 = vector.broadcast %c2_i32_33 : i32 to vector<16x32xi32>
    %120 = arith.cmpi slt, %101, %119 : vector<16x32xi32>
    %121 = arith.select %120, %104, %118 : vector<16x32xi1>, vector<16x32xf32>
    %c14_i32 = arith.constant 14 : i32
    %122 = tpu.dynamic_rotate %100 by %c14_i32 dim 0 : vector<16x32xf32>, i32 -> vector<16x32xf32>
    %c14_i32_34 = arith.constant 14 : i32
    %123 = vector.broadcast %c14_i32_34 : i32 to vector<16x32xi32>
    %124 = arith.cmpi sge, %101, %123 : vector<16x32xi32>
    %125 = arith.select %124, %107, %122 : vector<16x32xi1>, vector<16x32xf32>
    %126 = arith.addf %117, %121 : vector<16x32xf32>
    %127 = arith.addf %126, %125 : vector<16x32xf32>
    %cst_35 = arith.constant 2.000000e-01 : f32
    %128 = vector.broadcast %cst_35 : f32 to vector<16x32xf32>
    %129 = arith.mulf %127, %128 : vector<16x32xf32>
    %130 = arith.subf %100, %129 : vector<16x32xf32>
    %c0_36 = arith.constant 0 : index
    %c0_37 = arith.constant 0 : index
    %c0_38 = arith.constant 0 : index
    %131 = vector.load %arg6[%c0_36, %c0_37, %c0_38] : memref<2x32x64xf32, #tpu.memory_space<vmem>>, vector<1x32x64xf32>
    %132 = vector.shape_cast %131 : vector<1x32x64xf32> to vector<32x64xf32>
    %133 = arith.truncf %130 : vector<16x32xf32> to vector<16x32xbf16>
    %134 = arith.truncf %132 : vector<32x64xf32> to vector<32x64xbf16>
    %cst_39 = arith.constant dense<0.000000e+00> : vector<16x64xf32>
    %135 = tpu.matmul %133, %134, %cst_39 {dimension_numbers = #tpu.dot_dimension_numbers<[1], [0], [0], [1], [0, 0, 1, 1], [], []>} : vector<16x32xbf16>, vector<32x64xbf16>, vector<16x64xf32> -> vector<16x64xf32>
    %cst_40 = arith.constant 0.000000e+00 : f32
    %136 = vector.broadcast %cst_40 : f32 to vector<16x64xf32>
    %137 = arith.maximumf %135, %136 : vector<16x64xf32>
    %c0_41 = arith.constant 0 : index
    %c0_42 = arith.constant 0 : index
    %c0_43 = arith.constant 0 : index
    %138 = vector.load %arg7[%c0_41, %c0_42, %c0_43] : memref<2x64x32xf32, #tpu.memory_space<vmem>>, vector<1x64x32xf32>
    %139 = vector.shape_cast %138 : vector<1x64x32xf32> to vector<64x32xf32>
    %140 = arith.truncf %137 : vector<16x64xf32> to vector<16x64xbf16>
    %141 = arith.truncf %139 : vector<64x32xf32> to vector<64x32xbf16>
    %cst_44 = arith.constant dense<0.000000e+00> : vector<16x32xf32>
    %142 = tpu.matmul %140, %141, %cst_44 {dimension_numbers = #tpu.dot_dimension_numbers<[1], [0], [0], [1], [0, 0, 1, 1], [], []>} : vector<16x64xbf16>, vector<64x32xbf16>, vector<16x32xf32> -> vector<16x32xf32>
    %143 = arith.addf %130, %142 : vector<16x32xf32>
    %144 = tpu.iota {dimensions = array<i32: 0>} : vector<16x32xi32>
    %145 = vector.extract_strided_slice %143 {offsets = [0, 0], sizes = [1, 32], strides = [1, 1]} : vector<16x32xf32> to vector<1x32xf32>
    %146 = vector.shape_cast %145 : vector<1x32xf32> to vector<1x32xf32>
    %147 = vector.broadcast %146 : vector<1x32xf32> to vector<16x32xf32>
    %148 = vector.extract_strided_slice %143 {offsets = [15, 0], sizes = [1, 32], strides = [1, 1]} : vector<16x32xf32> to vector<1x32xf32>
    %149 = vector.shape_cast %148 : vector<1x32xf32> to vector<1x32xf32>
    %150 = vector.broadcast %149 : vector<1x32xf32> to vector<16x32xf32>
    %c1_i32_45 = arith.constant 1 : i32
    %151 = tpu.dynamic_rotate %143 by %c1_i32_45 dim 0 : vector<16x32xf32>, i32 -> vector<16x32xf32>
    %c1_i32_46 = arith.constant 1 : i32
    %152 = vector.broadcast %c1_i32_46 : i32 to vector<16x32xi32>
    %153 = arith.cmpi slt, %144, %152 : vector<16x32xi32>
    %154 = arith.select %153, %147, %151 : vector<16x32xi1>, vector<16x32xf32>
    %c15_i32_47 = arith.constant 15 : i32
    %155 = tpu.dynamic_rotate %143 by %c15_i32_47 dim 0 : vector<16x32xf32>, i32 -> vector<16x32xf32>
    %c15_i32_48 = arith.constant 15 : i32
    %156 = vector.broadcast %c15_i32_48 : i32 to vector<16x32xi32>
    %157 = arith.cmpi sge, %144, %156 : vector<16x32xi32>
    %158 = arith.select %157, %150, %155 : vector<16x32xi1>, vector<16x32xf32>
    %159 = arith.addf %143, %154 : vector<16x32xf32>
    %160 = arith.addf %159, %158 : vector<16x32xf32>
    %c2_i32_49 = arith.constant 2 : i32
    %161 = tpu.dynamic_rotate %143 by %c2_i32_49 dim 0 : vector<16x32xf32>, i32 -> vector<16x32xf32>
    %c2_i32_50 = arith.constant 2 : i32
    %162 = vector.broadcast %c2_i32_50 : i32 to vector<16x32xi32>
    %163 = arith.cmpi slt, %144, %162 : vector<16x32xi32>
    %164 = arith.select %163, %147, %161 : vector<16x32xi1>, vector<16x32xf32>
    %c14_i32_51 = arith.constant 14 : i32
    %165 = tpu.dynamic_rotate %143 by %c14_i32_51 dim 0 : vector<16x32xf32>, i32 -> vector<16x32xf32>
    %c14_i32_52 = arith.constant 14 : i32
    %166 = vector.broadcast %c14_i32_52 : i32 to vector<16x32xi32>
    %167 = arith.cmpi sge, %144, %166 : vector<16x32xi32>
    %168 = arith.select %167, %150, %165 : vector<16x32xi1>, vector<16x32xf32>
    %169 = arith.addf %160, %164 : vector<16x32xf32>
    %170 = arith.addf %169, %168 : vector<16x32xf32>
    %cst_53 = arith.constant 2.000000e-01 : f32
    %171 = vector.broadcast %cst_53 : f32 to vector<16x32xf32>
    %172 = arith.mulf %170, %171 : vector<16x32xf32>
    %173 = arith.subf %143, %172 : vector<16x32xf32>
    %c1 = arith.constant 1 : index
    %c0_54 = arith.constant 0 : index
    %c0_55 = arith.constant 0 : index
    %174 = vector.load %arg2[%c1, %c0_54, %c0_55] : memref<2x32x96xf32, #tpu.memory_space<vmem>>, vector<1x32x96xf32>
    %175 = vector.shape_cast %174 : vector<1x32x96xf32> to vector<32x96xf32>
    %176 = arith.truncf %173 : vector<16x32xf32> to vector<16x32xbf16>
    %177 = arith.truncf %175 : vector<32x96xf32> to vector<32x96xbf16>
    %cst_56 = arith.constant dense<0.000000e+00> : vector<16x96xf32>
    %178 = tpu.matmul %176, %177, %cst_56 {dimension_numbers = #tpu.dot_dimension_numbers<[1], [0], [0], [1], [0, 0, 1, 1], [], []>} : vector<16x32xbf16>, vector<32x96xbf16>, vector<16x96xf32> -> vector<16x96xf32>
    %c1_57 = arith.constant 1 : index
    %c0_58 = arith.constant 0 : index
    %c0_59 = arith.constant 0 : index
    %179 = vector.load %arg3[%c1_57, %c0_58, %c0_59] : memref<2x1x96xf32, #tpu.memory_space<vmem>>, vector<1x1x96xf32>
    %180 = vector.shape_cast %179 : vector<1x1x96xf32> to vector<1x96xf32>
    %181 = vector.broadcast %180 : vector<1x96xf32> to vector<16x96xf32>
    %182 = arith.addf %178, %181 : vector<16x96xf32>
    %183 = vector.extract_strided_slice %182 {offsets = [0, 0], sizes = [16, 32], strides = [1, 1]} : vector<16x96xf32> to vector<16x32xf32>
    %184 = vector.extract_strided_slice %182 {offsets = [0, 32], sizes = [16, 32], strides = [1, 1]} : vector<16x96xf32> to vector<16x32xf32>
    %185 = vector.extract_strided_slice %182 {offsets = [0, 64], sizes = [16, 32], strides = [1, 1]} : vector<16x96xf32> to vector<16x32xf32>
    %186 = vector.extract_strided_slice %183 {offsets = [0, 0], sizes = [16, 8], strides = [1, 1]} : vector<16x32xf32> to vector<16x8xf32>
    %187 = vector.extract_strided_slice %184 {offsets = [0, 0], sizes = [16, 8], strides = [1, 1]} : vector<16x32xf32> to vector<16x8xf32>
    %188 = vector.extract_strided_slice %185 {offsets = [0, 0], sizes = [16, 8], strides = [1, 1]} : vector<16x32xf32> to vector<16x8xf32>
    %189 = arith.truncf %186 : vector<16x8xf32> to vector<16x8xbf16>
    %190 = arith.truncf %187 : vector<16x8xf32> to vector<16x8xbf16>
    %cst_60 = arith.constant dense<0.000000e+00> : vector<16x16xf32>
    %191 = tpu.matmul %189, %190, %cst_60 {dimension_numbers = #tpu.dot_dimension_numbers<[1], [1], [0], [0], [0, 0, 1, 0], [], []>} : vector<16x8xbf16>, vector<16x8xbf16>, vector<16x16xf32> -> vector<16x16xf32>
    %cst_61 = arith.constant dense<0xFF800000> : vector<16xf32>
    %192 = vector.multi_reduction <maximumf>, %191, %cst_61 [1] : vector<16x16xf32> to vector<16xf32>
    %193 = vector.shape_cast %192 : vector<16xf32> to vector<16x1xf32>
    %194 = vector.broadcast %193 : vector<16x1xf32> to vector<16x16xf32>
    %195 = arith.subf %191, %194 : vector<16x16xf32>
    %196 = math.exp %195 : vector<16x16xf32>
    %cst_62 = arith.constant dense<0.000000e+00> : vector<16xf32>
    %197 = vector.multi_reduction <add>, %196, %cst_62 [1] : vector<16x16xf32> to vector<16xf32>
    %198 = vector.shape_cast %197 : vector<16xf32> to vector<16x1xf32>
    %199 = tpu.reciprocal %198 {approx = true} : vector<16x1xf32> -> vector<16x1xf32>
    %200 = vector.broadcast %199 : vector<16x1xf32> to vector<16x16xf32>
    %201 = arith.mulf %196, %200 : vector<16x16xf32>
    %202 = arith.truncf %201 : vector<16x16xf32> to vector<16x16xbf16>
    %203 = arith.truncf %188 : vector<16x8xf32> to vector<16x8xbf16>
    %cst_63 = arith.constant dense<0.000000e+00> : vector<16x8xf32>
    %204 = tpu.matmul %202, %203, %cst_63 {dimension_numbers = #tpu.dot_dimension_numbers<[1], [0], [0], [1], [0, 0, 1, 1], [], []>} : vector<16x16xbf16>, vector<16x8xbf16>, vector<16x8xf32> -> vector<16x8xf32>
    %205 = vector.extract_strided_slice %183 {offsets = [0, 8], sizes = [16, 8], strides = [1, 1]} : vector<16x32xf32> to vector<16x8xf32>
    %206 = vector.extract_strided_slice %184 {offsets = [0, 8], sizes = [16, 8], strides = [1, 1]} : vector<16x32xf32> to vector<16x8xf32>
    %207 = vector.extract_strided_slice %185 {offsets = [0, 8], sizes = [16, 8], strides = [1, 1]} : vector<16x32xf32> to vector<16x8xf32>
    %208 = arith.truncf %205 : vector<16x8xf32> to vector<16x8xbf16>
    %209 = arith.truncf %206 : vector<16x8xf32> to vector<16x8xbf16>
    %cst_64 = arith.constant dense<0.000000e+00> : vector<16x16xf32>
    %210 = tpu.matmul %208, %209, %cst_64 {dimension_numbers = #tpu.dot_dimension_numbers<[1], [1], [0], [0], [0, 0, 1, 0], [], []>} : vector<16x8xbf16>, vector<16x8xbf16>, vector<16x16xf32> -> vector<16x16xf32>
    %cst_65 = arith.constant dense<0xFF800000> : vector<16xf32>
    %211 = vector.multi_reduction <maximumf>, %210, %cst_65 [1] : vector<16x16xf32> to vector<16xf32>
    %212 = vector.shape_cast %211 : vector<16xf32> to vector<16x1xf32>
    %213 = vector.broadcast %212 : vector<16x1xf32> to vector<16x16xf32>
    %214 = arith.subf %210, %213 : vector<16x16xf32>
    %215 = math.exp %214 : vector<16x16xf32>
    %cst_66 = arith.constant dense<0.000000e+00> : vector<16xf32>
    %216 = vector.multi_reduction <add>, %215, %cst_66 [1] : vector<16x16xf32> to vector<16xf32>
    %217 = vector.shape_cast %216 : vector<16xf32> to vector<16x1xf32>
    %218 = tpu.reciprocal %217 {approx = true} : vector<16x1xf32> -> vector<16x1xf32>
    %219 = vector.broadcast %218 : vector<16x1xf32> to vector<16x16xf32>
    %220 = arith.mulf %215, %219 : vector<16x16xf32>
    %221 = arith.truncf %220 : vector<16x16xf32> to vector<16x16xbf16>
    %222 = arith.truncf %207 : vector<16x8xf32> to vector<16x8xbf16>
    %cst_67 = arith.constant dense<0.000000e+00> : vector<16x8xf32>
    %223 = tpu.matmul %221, %222, %cst_67 {dimension_numbers = #tpu.dot_dimension_numbers<[1], [0], [0], [1], [0, 0, 1, 1], [], []>} : vector<16x16xbf16>, vector<16x8xbf16>, vector<16x8xf32> -> vector<16x8xf32>
    %224 = vector.extract_strided_slice %183 {offsets = [0, 16], sizes = [16, 8], strides = [1, 1]} : vector<16x32xf32> to vector<16x8xf32>
    %225 = vector.extract_strided_slice %184 {offsets = [0, 16], sizes = [16, 8], strides = [1, 1]} : vector<16x32xf32> to vector<16x8xf32>
    %226 = vector.extract_strided_slice %185 {offsets = [0, 16], sizes = [16, 8], strides = [1, 1]} : vector<16x32xf32> to vector<16x8xf32>
    %227 = arith.truncf %224 : vector<16x8xf32> to vector<16x8xbf16>
    %228 = arith.truncf %225 : vector<16x8xf32> to vector<16x8xbf16>
    %cst_68 = arith.constant dense<0.000000e+00> : vector<16x16xf32>
    %229 = tpu.matmul %227, %228, %cst_68 {dimension_numbers = #tpu.dot_dimension_numbers<[1], [1], [0], [0], [0, 0, 1, 0], [], []>} : vector<16x8xbf16>, vector<16x8xbf16>, vector<16x16xf32> -> vector<16x16xf32>
    %cst_69 = arith.constant dense<0xFF800000> : vector<16xf32>
    %230 = vector.multi_reduction <maximumf>, %229, %cst_69 [1] : vector<16x16xf32> to vector<16xf32>
    %231 = vector.shape_cast %230 : vector<16xf32> to vector<16x1xf32>
    %232 = vector.broadcast %231 : vector<16x1xf32> to vector<16x16xf32>
    %233 = arith.subf %229, %232 : vector<16x16xf32>
    %234 = math.exp %233 : vector<16x16xf32>
    %cst_70 = arith.constant dense<0.000000e+00> : vector<16xf32>
    %235 = vector.multi_reduction <add>, %234, %cst_70 [1] : vector<16x16xf32> to vector<16xf32>
    %236 = vector.shape_cast %235 : vector<16xf32> to vector<16x1xf32>
    %237 = tpu.reciprocal %236 {approx = true} : vector<16x1xf32> -> vector<16x1xf32>
    %238 = vector.broadcast %237 : vector<16x1xf32> to vector<16x16xf32>
    %239 = arith.mulf %234, %238 : vector<16x16xf32>
    %240 = arith.truncf %239 : vector<16x16xf32> to vector<16x16xbf16>
    %241 = arith.truncf %226 : vector<16x8xf32> to vector<16x8xbf16>
    %cst_71 = arith.constant dense<0.000000e+00> : vector<16x8xf32>
    %242 = tpu.matmul %240, %241, %cst_71 {dimension_numbers = #tpu.dot_dimension_numbers<[1], [0], [0], [1], [0, 0, 1, 1], [], []>} : vector<16x16xbf16>, vector<16x8xbf16>, vector<16x8xf32> -> vector<16x8xf32>
    %243 = vector.extract_strided_slice %183 {offsets = [0, 24], sizes = [16, 8], strides = [1, 1]} : vector<16x32xf32> to vector<16x8xf32>
    %244 = vector.extract_strided_slice %184 {offsets = [0, 24], sizes = [16, 8], strides = [1, 1]} : vector<16x32xf32> to vector<16x8xf32>
    %245 = vector.extract_strided_slice %185 {offsets = [0, 24], sizes = [16, 8], strides = [1, 1]} : vector<16x32xf32> to vector<16x8xf32>
    %246 = arith.truncf %243 : vector<16x8xf32> to vector<16x8xbf16>
    %247 = arith.truncf %244 : vector<16x8xf32> to vector<16x8xbf16>
    %cst_72 = arith.constant dense<0.000000e+00> : vector<16x16xf32>
    %248 = tpu.matmul %246, %247, %cst_72 {dimension_numbers = #tpu.dot_dimension_numbers<[1], [1], [0], [0], [0, 0, 1, 0], [], []>} : vector<16x8xbf16>, vector<16x8xbf16>, vector<16x16xf32> -> vector<16x16xf32>
    %cst_73 = arith.constant dense<0xFF800000> : vector<16xf32>
    %249 = vector.multi_reduction <maximumf>, %248, %cst_73 [1] : vector<16x16xf32> to vector<16xf32>
    %250 = vector.shape_cast %249 : vector<16xf32> to vector<16x1xf32>
    %251 = vector.broadcast %250 : vector<16x1xf32> to vector<16x16xf32>
    %252 = arith.subf %248, %251 : vector<16x16xf32>
    %253 = math.exp %252 : vector<16x16xf32>
    %cst_74 = arith.constant dense<0.000000e+00> : vector<16xf32>
    %254 = vector.multi_reduction <add>, %253, %cst_74 [1] : vector<16x16xf32> to vector<16xf32>
    %255 = vector.shape_cast %254 : vector<16xf32> to vector<16x1xf32>
    %256 = tpu.reciprocal %255 {approx = true} : vector<16x1xf32> -> vector<16x1xf32>
    %257 = vector.broadcast %256 : vector<16x1xf32> to vector<16x16xf32>
    %258 = arith.mulf %253, %257 : vector<16x16xf32>
    %259 = arith.truncf %258 : vector<16x16xf32> to vector<16x16xbf16>
    %260 = arith.truncf %245 : vector<16x8xf32> to vector<16x8xbf16>
    %cst_75 = arith.constant dense<0.000000e+00> : vector<16x8xf32>
    %261 = tpu.matmul %259, %260, %cst_75 {dimension_numbers = #tpu.dot_dimension_numbers<[1], [0], [0], [1], [0, 0, 1, 1], [], []>} : vector<16x16xbf16>, vector<16x8xbf16>, vector<16x8xf32> -> vector<16x8xf32>
    %262 = tpu.concatenate %204, %223, %242, %261 in 1 : vector<16x8xf32>, vector<16x8xf32>, vector<16x8xf32>, vector<16x8xf32> -> vector<16x32xf32>
    %c1_76 = arith.constant 1 : index
    %c0_77 = arith.constant 0 : index
    %c0_78 = arith.constant 0 : index
    %263 = vector.load %arg4[%c1_76, %c0_77, %c0_78] : memref<2x32x32xf32, #tpu.memory_space<vmem>>, vector<1x32x32xf32>
    %264 = vector.shape_cast %263 : vector<1x32x32xf32> to vector<32x32xf32>
    %265 = arith.truncf %262 : vector<16x32xf32> to vector<16x32xbf16>
    %266 = arith.truncf %264 : vector<32x32xf32> to vector<32x32xbf16>
    %cst_79 = arith.constant dense<0.000000e+00> : vector<16x32xf32>
    %267 = tpu.matmul %265, %266, %cst_79 {dimension_numbers = #tpu.dot_dimension_numbers<[1], [0], [0], [1], [0, 0, 1, 1], [], []>} : vector<16x32xbf16>, vector<32x32xbf16>, vector<16x32xf32> -> vector<16x32xf32>
    %c1_80 = arith.constant 1 : index
    %c0_81 = arith.constant 0 : index
    %c0_82 = arith.constant 0 : index
    %268 = vector.load %arg5[%c1_80, %c0_81, %c0_82] : memref<2x1x32xf32, #tpu.memory_space<vmem>>, vector<1x1x32xf32>
    %269 = vector.shape_cast %268 : vector<1x1x32xf32> to vector<1x32xf32>
    %270 = vector.broadcast %269 : vector<1x32xf32> to vector<16x32xf32>
    %271 = arith.addf %267, %270 : vector<16x32xf32>
    %272 = arith.addf %173, %271 : vector<16x32xf32>
    %273 = tpu.iota {dimensions = array<i32: 0>} : vector<16x32xi32>
    %274 = vector.extract_strided_slice %272 {offsets = [0, 0], sizes = [1, 32], strides = [1, 1]} : vector<16x32xf32> to vector<1x32xf32>
    %275 = vector.shape_cast %274 : vector<1x32xf32> to vector<1x32xf32>
    %276 = vector.broadcast %275 : vector<1x32xf32> to vector<16x32xf32>
    %277 = vector.extract_strided_slice %272 {offsets = [15, 0], sizes = [1, 32], strides = [1, 1]} : vector<16x32xf32> to vector<1x32xf32>
    %278 = vector.shape_cast %277 : vector<1x32xf32> to vector<1x32xf32>
    %279 = vector.broadcast %278 : vector<1x32xf32> to vector<16x32xf32>
    %c1_i32_83 = arith.constant 1 : i32
    %280 = tpu.dynamic_rotate %272 by %c1_i32_83 dim 0 : vector<16x32xf32>, i32 -> vector<16x32xf32>
    %c1_i32_84 = arith.constant 1 : i32
    %281 = vector.broadcast %c1_i32_84 : i32 to vector<16x32xi32>
    %282 = arith.cmpi slt, %273, %281 : vector<16x32xi32>
    %283 = arith.select %282, %276, %280 : vector<16x32xi1>, vector<16x32xf32>
    %c15_i32_85 = arith.constant 15 : i32
    %284 = tpu.dynamic_rotate %272 by %c15_i32_85 dim 0 : vector<16x32xf32>, i32 -> vector<16x32xf32>
    %c15_i32_86 = arith.constant 15 : i32
    %285 = vector.broadcast %c15_i32_86 : i32 to vector<16x32xi32>
    %286 = arith.cmpi sge, %273, %285 : vector<16x32xi32>
    %287 = arith.select %286, %279, %284 : vector<16x32xi1>, vector<16x32xf32>
    %288 = arith.addf %272, %283 : vector<16x32xf32>
    %289 = arith.addf %288, %287 : vector<16x32xf32>
    %c2_i32_87 = arith.constant 2 : i32
    %290 = tpu.dynamic_rotate %272 by %c2_i32_87 dim 0 : vector<16x32xf32>, i32 -> vector<16x32xf32>
    %c2_i32_88 = arith.constant 2 : i32
    %291 = vector.broadcast %c2_i32_88 : i32 to vector<16x32xi32>
    %292 = arith.cmpi slt, %273, %291 : vector<16x32xi32>
    %293 = arith.select %292, %276, %290 : vector<16x32xi1>, vector<16x32xf32>
    %c14_i32_89 = arith.constant 14 : i32
    %294 = tpu.dynamic_rotate %272 by %c14_i32_89 dim 0 : vector<16x32xf32>, i32 -> vector<16x32xf32>
    %c14_i32_90 = arith.constant 14 : i32
    %295 = vector.broadcast %c14_i32_90 : i32 to vector<16x32xi32>
    %296 = arith.cmpi sge, %273, %295 : vector<16x32xi32>
    %297 = arith.select %296, %279, %294 : vector<16x32xi1>, vector<16x32xf32>
    %298 = arith.addf %289, %293 : vector<16x32xf32>
    %299 = arith.addf %298, %297 : vector<16x32xf32>
    %cst_91 = arith.constant 2.000000e-01 : f32
    %300 = vector.broadcast %cst_91 : f32 to vector<16x32xf32>
    %301 = arith.mulf %299, %300 : vector<16x32xf32>
    %302 = arith.subf %272, %301 : vector<16x32xf32>
    %c1_92 = arith.constant 1 : index
    %c0_93 = arith.constant 0 : index
    %c0_94 = arith.constant 0 : index
    %303 = vector.load %arg6[%c1_92, %c0_93, %c0_94] : memref<2x32x64xf32, #tpu.memory_space<vmem>>, vector<1x32x64xf32>
    %304 = vector.shape_cast %303 : vector<1x32x64xf32> to vector<32x64xf32>
    %305 = arith.truncf %302 : vector<16x32xf32> to vector<16x32xbf16>
    %306 = arith.truncf %304 : vector<32x64xf32> to vector<32x64xbf16>
    %cst_95 = arith.constant dense<0.000000e+00> : vector<16x64xf32>
    %307 = tpu.matmul %305, %306, %cst_95 {dimension_numbers = #tpu.dot_dimension_numbers<[1], [0], [0], [1], [0, 0, 1, 1], [], []>} : vector<16x32xbf16>, vector<32x64xbf16>, vector<16x64xf32> -> vector<16x64xf32>
    %cst_96 = arith.constant 0.000000e+00 : f32
    %308 = vector.broadcast %cst_96 : f32 to vector<16x64xf32>
    %309 = arith.maximumf %307, %308 : vector<16x64xf32>
    %c1_97 = arith.constant 1 : index
    %c0_98 = arith.constant 0 : index
    %c0_99 = arith.constant 0 : index
    %310 = vector.load %arg7[%c1_97, %c0_98, %c0_99] : memref<2x64x32xf32, #tpu.memory_space<vmem>>, vector<1x64x32xf32>
    %311 = vector.shape_cast %310 : vector<1x64x32xf32> to vector<64x32xf32>
    %312 = arith.truncf %309 : vector<16x64xf32> to vector<16x64xbf16>
    %313 = arith.truncf %311 : vector<64x32xf32> to vector<64x32xbf16>
    %cst_100 = arith.constant dense<0.000000e+00> : vector<16x32xf32>
    %314 = tpu.matmul %312, %313, %cst_100 {dimension_numbers = #tpu.dot_dimension_numbers<[1], [0], [0], [1], [0, 0, 1, 1], [], []>} : vector<16x64xbf16>, vector<64x32xbf16>, vector<16x32xf32> -> vector<16x32xf32>
    %315 = arith.addf %302, %314 : vector<16x32xf32>
    %316 = tpu.iota {dimensions = array<i32: 0>} : vector<16x32xi32>
    %317 = vector.extract_strided_slice %315 {offsets = [0, 0], sizes = [1, 32], strides = [1, 1]} : vector<16x32xf32> to vector<1x32xf32>
    %318 = vector.shape_cast %317 : vector<1x32xf32> to vector<1x32xf32>
    %319 = vector.broadcast %318 : vector<1x32xf32> to vector<16x32xf32>
    %320 = vector.extract_strided_slice %315 {offsets = [15, 0], sizes = [1, 32], strides = [1, 1]} : vector<16x32xf32> to vector<1x32xf32>
    %321 = vector.shape_cast %320 : vector<1x32xf32> to vector<1x32xf32>
    %322 = vector.broadcast %321 : vector<1x32xf32> to vector<16x32xf32>
    %c1_i32_101 = arith.constant 1 : i32
    %323 = tpu.dynamic_rotate %315 by %c1_i32_101 dim 0 : vector<16x32xf32>, i32 -> vector<16x32xf32>
    %c1_i32_102 = arith.constant 1 : i32
    %324 = vector.broadcast %c1_i32_102 : i32 to vector<16x32xi32>
    %325 = arith.cmpi slt, %316, %324 : vector<16x32xi32>
    %326 = arith.select %325, %319, %323 : vector<16x32xi1>, vector<16x32xf32>
    %c15_i32_103 = arith.constant 15 : i32
    %327 = tpu.dynamic_rotate %315 by %c15_i32_103 dim 0 : vector<16x32xf32>, i32 -> vector<16x32xf32>
    %c15_i32_104 = arith.constant 15 : i32
    %328 = vector.broadcast %c15_i32_104 : i32 to vector<16x32xi32>
    %329 = arith.cmpi sge, %316, %328 : vector<16x32xi32>
    %330 = arith.select %329, %322, %327 : vector<16x32xi1>, vector<16x32xf32>
    %331 = arith.addf %315, %326 : vector<16x32xf32>
    %332 = arith.addf %331, %330 : vector<16x32xf32>
    %c2_i32_105 = arith.constant 2 : i32
    %333 = tpu.dynamic_rotate %315 by %c2_i32_105 dim 0 : vector<16x32xf32>, i32 -> vector<16x32xf32>
    %c2_i32_106 = arith.constant 2 : i32
    %334 = vector.broadcast %c2_i32_106 : i32 to vector<16x32xi32>
    %335 = arith.cmpi slt, %316, %334 : vector<16x32xi32>
    %336 = arith.select %335, %319, %333 : vector<16x32xi1>, vector<16x32xf32>
    %c14_i32_107 = arith.constant 14 : i32
    %337 = tpu.dynamic_rotate %315 by %c14_i32_107 dim 0 : vector<16x32xf32>, i32 -> vector<16x32xf32>
    %c14_i32_108 = arith.constant 14 : i32
    %338 = vector.broadcast %c14_i32_108 : i32 to vector<16x32xi32>
    %339 = arith.cmpi sge, %316, %338 : vector<16x32xi32>
    %340 = arith.select %339, %322, %337 : vector<16x32xi1>, vector<16x32xf32>
    %341 = arith.addf %332, %336 : vector<16x32xf32>
    %342 = arith.addf %341, %340 : vector<16x32xf32>
    %cst_109 = arith.constant 2.000000e-01 : f32
    %343 = vector.broadcast %cst_109 : f32 to vector<16x32xf32>
    %344 = arith.mulf %342, %343 : vector<16x32xf32>
    %345 = arith.subf %315, %344 : vector<16x32xf32>
    %cst_110 = arith.constant dense<0.000000e+00> : vector<16xf32>
    %346 = vector.multi_reduction <add>, %345, %cst_110 [1] : vector<16x32xf32> to vector<16xf32>
    %347 = vector.shape_cast %346 : vector<16xf32> to vector<16x1xf32>
    %cst_111 = arith.constant 3.200000e+01 : f32
    %348 = vector.broadcast %cst_111 : f32 to vector<16x1xf32>
    %349 = arith.divf %347, %348 : vector<16x1xf32>
    %350 = vector.broadcast %349 : vector<16x1xf32> to vector<16x32xf32>
    %351 = arith.subf %345, %350 : vector<16x32xf32>
    %352 = arith.mulf %351, %351 : vector<16x32xf32>
    %cst_112 = arith.constant dense<0.000000e+00> : vector<16xf32>
    %353 = vector.multi_reduction <add>, %352, %cst_112 [1] : vector<16x32xf32> to vector<16xf32>
    %354 = vector.shape_cast %353 : vector<16xf32> to vector<16x1xf32>
    %cst_113 = arith.constant 3.200000e+01 : f32
    %355 = vector.broadcast %cst_113 : f32 to vector<16x1xf32>
    %356 = arith.divf %354, %355 : vector<16x1xf32>
    %357 = vector.broadcast %349 : vector<16x1xf32> to vector<16x32xf32>
    %358 = arith.subf %345, %357 : vector<16x32xf32>
    %cst_114 = arith.constant 9.99999974E-6 : f32
    %359 = vector.broadcast %cst_114 : f32 to vector<16x1xf32>
    %360 = arith.addf %356, %359 : vector<16x1xf32>
    %361 = math.rsqrt %360 : vector<16x1xf32>
    %362 = vector.broadcast %361 : vector<16x1xf32> to vector<16x32xf32>
    %363 = arith.mulf %358, %362 : vector<16x32xf32>
    %c0_115 = arith.constant 0 : index
    %c0_116 = arith.constant 0 : index
    %364 = vector.load %arg8[%c0_115, %c0_116] : memref<1x32xf32, #tpu.memory_space<vmem>>, vector<1x32xf32>
    %365 = vector.broadcast %364 : vector<1x32xf32> to vector<16x32xf32>
    %366 = arith.mulf %363, %365 : vector<16x32xf32>
    %c0_117 = arith.constant 0 : index
    %c0_118 = arith.constant 0 : index
    %367 = vector.load %arg9[%c0_117, %c0_118] : memref<1x32xf32, #tpu.memory_space<vmem>>, vector<1x32xf32>
    %368 = vector.broadcast %367 : vector<1x32xf32> to vector<16x32xf32>
    %369 = arith.addf %366, %368 : vector<16x32xf32>
    %cst_119 = arith.constant dense<0.000000e+00> : vector<32xf32>
    %370 = vector.multi_reduction <add>, %369, %cst_119 [0] : vector<16x32xf32> to vector<32xf32>
    %371 = vector.shape_cast %370 : vector<32xf32> to vector<1x32xf32>
    %cst_120 = arith.constant 1.600000e+01 : f32
    %372 = vector.broadcast %cst_120 : f32 to vector<1x32xf32>
    %373 = arith.divf %371, %372 : vector<1x32xf32>
    %374 = vector.broadcast %373 : vector<1x32xf32> to vector<16x32xf32>
    %375 = arith.subf %369, %374 : vector<16x32xf32>
    %376 = vector.extract_strided_slice %375 {offsets = [0, 0], sizes = [4, 32], strides = [1, 1]} : vector<16x32xf32> to vector<4x32xf32>
    %377 = vector.extract_strided_slice %375 {offsets = [4, 0], sizes = [4, 32], strides = [1, 1]} : vector<16x32xf32> to vector<4x32xf32>
    %378 = vector.extract_strided_slice %375 {offsets = [8, 0], sizes = [4, 32], strides = [1, 1]} : vector<16x32xf32> to vector<4x32xf32>
    %379 = vector.extract_strided_slice %375 {offsets = [12, 0], sizes = [4, 32], strides = [1, 1]} : vector<16x32xf32> to vector<4x32xf32>
    %380 = tpu.concatenate %376, %377, %378, %379 in 1 : vector<4x32xf32>, vector<4x32xf32>, vector<4x32xf32>, vector<4x32xf32> -> vector<4x128xf32>
    %c0_121 = arith.constant 0 : index
    %c0_122 = arith.constant 0 : index
    %c0_123 = arith.constant 0 : index
    %381 = vector.load %arg10[%c0_121, %c0_122, %c0_123] : memref<1x4x128xf32, #tpu.memory_space<vmem>>, vector<1x4x128xf32>
    %382 = vector.shape_cast %381 : vector<1x4x128xf32> to vector<4x128xf32>
    %383 = vector.shape_cast %380 : vector<4x128xf32> to vector<1x4x128xf32>
    tpu.vector_store %arg10[%c0_121, %c0_122, %c0_123], %383 {strides = array<i32>} : memref<1x4x128xf32, #tpu.memory_space<vmem>>, vector<1x4x128xf32>,
    %384 = tpu.concatenate %29, %48, %67, %86, %201, %220, %239, %258 in 1 : vector<16x16xf32>, vector<16x16xf32>, vector<16x16xf32>, vector<16x16xf32>, vector<16x16xf32>, vector<16x16xf32>, vector<16x16xf32>, vector<16x16xf32> -> vector<16x128xf32>
    %c0_124 = arith.constant 0 : index
    %c0_125 = arith.constant 0 : index
    %c0_126 = arith.constant 0 : index
    %385 = vector.load %arg11[%c0_124, %c0_125, %c0_126] : memref<1x16x128xf32, #tpu.memory_space<vmem>>, vector<1x16x128xf32>
    %386 = vector.shape_cast %385 : vector<1x16x128xf32> to vector<16x128xf32>
    %387 = vector.shape_cast %384 : vector<16x128xf32> to vector<1x16x128xf32>
    tpu.vector_store %arg11[%c0_124, %c0_125, %c0_126], %387 {strides = array<i32>} : memref<1x16x128xf32, #tpu.memory_space<vmem>>, vector<1x16x128xf32>,
    return
  }
  func.func @transform_0(%arg0: i32) -> (i32, i32, i32) {
    %c0_i32 = arith.constant 0 : i32
    %c0_i32_0 = arith.constant 0 : i32
    %c0_i32_1 = arith.constant 0 : i32
    return %arg0, %c0_i32, %c0_i32_0 : i32, i32, i32
  }
  func.func @transform_1(%arg0: i32) -> (i32, i32, i32) {
    %c0_i32 = arith.constant 0 : i32
    %c0_i32_0 = arith.constant 0 : i32
    %c0_i32_1 = arith.constant 0 : i32
    %c0_i32_2 = arith.constant 0 : i32
    return %c0_i32, %c0_i32_0, %c0_i32_1 : i32, i32, i32
  }
  func.func @transform_2(%arg0: i32) -> (i32, i32, i32) {
    %c0_i32 = arith.constant 0 : i32
    %c0_i32_0 = arith.constant 0 : i32
    %c0_i32_1 = arith.constant 0 : i32
    %c0_i32_2 = arith.constant 0 : i32
    return %c0_i32, %c0_i32_0, %c0_i32_1 : i32, i32, i32
  }
  func.func @transform_3(%arg0: i32) -> (i32, i32, i32) {
    %c0_i32 = arith.constant 0 : i32
    %c0_i32_0 = arith.constant 0 : i32
    %c0_i32_1 = arith.constant 0 : i32
    %c0_i32_2 = arith.constant 0 : i32
    return %c0_i32, %c0_i32_0, %c0_i32_1 : i32, i32, i32
  }
  func.func @transform_4(%arg0: i32) -> (i32, i32, i32) {
    %c0_i32 = arith.constant 0 : i32
    %c0_i32_0 = arith.constant 0 : i32
    %c0_i32_1 = arith.constant 0 : i32
    %c0_i32_2 = arith.constant 0 : i32
    return %c0_i32, %c0_i32_0, %c0_i32_1 : i32, i32, i32
  }
  func.func @transform_5(%arg0: i32) -> (i32, i32, i32) {
    %c0_i32 = arith.constant 0 : i32
    %c0_i32_0 = arith.constant 0 : i32
    %c0_i32_1 = arith.constant 0 : i32
    %c0_i32_2 = arith.constant 0 : i32
    return %c0_i32, %c0_i32_0, %c0_i32_1 : i32, i32, i32
  }
  func.func @transform_6(%arg0: i32) -> (i32, i32, i32) {
    %c0_i32 = arith.constant 0 : i32
    %c0_i32_0 = arith.constant 0 : i32
    %c0_i32_1 = arith.constant 0 : i32
    %c0_i32_2 = arith.constant 0 : i32
    return %c0_i32, %c0_i32_0, %c0_i32_1 : i32, i32, i32
  }
  func.func @transform_7(%arg0: i32) -> (i32, i32) {
    %c0_i32 = arith.constant 0 : i32
    %c0_i32_0 = arith.constant 0 : i32
    %c0_i32_1 = arith.constant 0 : i32
    return %c0_i32, %c0_i32_0 : i32, i32
  }
  func.func @transform_8(%arg0: i32) -> (i32, i32) {
    %c0_i32 = arith.constant 0 : i32
    %c0_i32_0 = arith.constant 0 : i32
    %c0_i32_1 = arith.constant 0 : i32
    return %c0_i32, %c0_i32_0 : i32, i32
  }
  func.func @transform_9(%arg0: i32) -> (i32, i32, i32) {
    %c0_i32 = arith.constant 0 : i32
    %c0_i32_0 = arith.constant 0 : i32
    %c0_i32_1 = arith.constant 0 : i32
    return %arg0, %c0_i32, %c0_i32_0 : i32, i32, i32
  }
  func.func @transform_10(%arg0: i32) -> (i32, i32, i32) {
    %c0_i32 = arith.constant 0 : i32
    %c0_i32_0 = arith.constant 0 : i32
    %c0_i32_1 = arith.constant 0 : i32
    return %arg0, %c0_i32, %c0_i32_0 : i32, i32, i32
  }
}

</mosaic_0001>

<llo_original>
// kernel: encoder_forward.1
$region0: #{encoder_forward.1}
  #allocation0 [shape = 'u32[]', space=smem, size = 0x4, offset = 0x4, fixed_abs, tag = 'smem constant byte address 0x4 - core index']
  #allocation1 [shape = 'u32[144,128]{1,0:T(1,128)}', space=vmem, size = 0x12000, scoped, tag = 'internal scratch']
  %s0 = inlined_call_operand.vmem [shape: f32[2,16,32], index: 0, kind: input, shape index: {}]
  %s1 = inlined_call_operand.vmem [shape: f32[2,32,96], index: 1, kind: input, shape index: {}]
  %s2 = inlined_call_operand.vmem [shape: f32[2,1,96], index: 2, kind: input, shape index: {}]
  %s3 = inlined_call_operand.vmem [shape: f32[2,32,32], index: 3, kind: input, shape index: {}]
  %s4 = inlined_call_operand.vmem [shape: f32[2,1,32], index: 4, kind: input, shape index: {}]
  %s5 = inlined_call_operand.vmem [shape: f32[2,32,64], index: 5, kind: input, shape index: {}]
  %s6 = inlined_call_operand.vmem [shape: f32[2,64,32], index: 6, kind: input, shape index: {}]
  %s7 = inlined_call_operand.vmem [shape: f32[1,32], index: 7, kind: input, shape index: {}]
  %s8 = inlined_call_operand.vmem [shape: f32[1,32], index: 8, kind: input, shape index: {}]
  %s9 = inlined_call_operand.vmem [shape: f32[2,4,128], index: 9, kind: output, shape index: {0}]
  %s10 = inlined_call_operand.vmem [shape: f32[2,16,128], index: 10, kind: output, shape index: {1}]
  %11 = xla_tuple %s9, %s10
  %s12 = sld [smem:[#allocation0]]
  $region77: #{encoder_forward.1} parent=0
    _
  %s14 = ssub.s32 1, %s12
  %s15 = scalar_select 0, %s14, %s12
  loop: start=0, step=1, limit=4
  $region2: #{encoder_forward.1} parent=0 // loop_pre_header
    _
  $region3: #{encoder_forward.1} parent=0 // loop_header
    %s17 = sphi 0, %s21
    %p18 = scmp.ge.s32.totalorder %s17, 4
    %s27 = sphi 0, %s29
    %s30 = sphi 0, %s27
    %s31 = sphi 0, %s30
    %s47 = sphi 0, %s31
    %s51 = sphi 0, %s51
    %s53 = sphi 0, %s51
    %s54 = sphi 0, %s53
    %s68 = sphi 0, %s54
    %s72 = sphi 0, %s72
    %s74 = sphi 0, %s72
    %s75 = sphi 0, %s74
    %s89 = sphi 0, %s75
    %s93 = sphi 0, %s93
    %s95 = sphi 0, %s93
    %s96 = sphi 0, %s95
    %s110 = sphi 0, %s96
    %s114 = sphi 0, %s114
    %s116 = sphi 0, %s114
    %s117 = sphi 0, %s116
    %s131 = sphi 0, %s117
    %s135 = sphi 0, %s135
    %s137 = sphi 0, %s135
    %s138 = sphi 0, %s137
    %s152 = sphi 0, %s138
    %s156 = sphi 0, %s156
    %s158 = sphi 0, %s156
    %s159 = sphi 0, %s158
    %s173 = sphi 0, %s159
    %s177 = sphi 0, %s177
    %s179 = sphi 0, %s177
    %s180 = sphi 0, %s179
    %s194 = sphi 0, %s180
    %s198 = sphi 0, %s198
    %s200 = sphi 0, %s198
    %s201 = sphi 0, %s200
    %s215 = sphi 0, %s201
    %s221 = sphi 0, %s223
    %s224 = sphi 0, %s221
    %s225 = sphi 0, %s224
    %s241 = sphi 0, %s225
    %s247 = sphi 0, %s249
    %s250 = sphi 0, %s247
    %s251 = sphi 0, %s250
    %s267 = sphi 0, %s251
  $region4: #{encoder_forward.1} parent=0 // loop_header_branch
    %20 = sbr.rel (%p18) target = $region8
  $region5: #{encoder_forward.1} parent=0 // loop_body
    %s22 = ssub.s32 %s17, 1
    %s23 = ssub.s32 %s17, 2
    %s24 = sadd.s32 %s17, 1
    %s25 = ssub.s32 %s17, %s24
    %p26 = scmp.eq.s32.totalorder %s25, 0
    %s28 = sadd.s32 %s27, 1
    %s29 = scalar_select %p26, %s27, %s28
    %p32 = pneg %p26
    %p33 = scmp.eq.s32.totalorder %s17, 1
    %p34 = por %p32, %p33
    %p35 = scmp.ne.s32.totalorder %s27, %s30
    %p36 = scmp.eq.s32.totalorder %s17, 0
    %p37 = por %p35, %p36
    %p38 = scmp.ne.s32.totalorder %s27, %s30
    %p39 = scmp.eq.s32.totalorder %s22, 1
    %p40 = por %p38, %p39
    %p41 = scmp.ne.s32.totalorder %s30, %s31
    %p42 = scmp.eq.s32.totalorder %s22, 0
    %p43 = por %p41, %p42
    %p44 = scmp.ne.s32.totalorder %s30, %s31
    %p45 = scmp.eq.s32.totalorder %s23, 1
    %p46 = por %p44, %p45
    %p48 = scmp.ne.s32.totalorder %s31, %s47
    %p49 = scmp.eq.s32.totalorder %s23, 0
    %p50 = por %p48, %p49
    %s52 = sadd.s32 %s51, 1
    %p55 = scmp.eq.s32.totalorder %s17, 1
    %p56 = scmp.ne.s32.totalorder %s51, %s53
    %p57 = scmp.eq.s32.totalorder %s17, 0
    %p58 = por %p56, %p57
    %p59 = scmp.ne.s32.totalorder %s51, %s53
    %p60 = scmp.eq.s32.totalorder %s22, 1
    %p61 = por %p59, %p60
    %p62 = scmp.ne.s32.totalorder %s53, %s54
    %p63 = scmp.eq.s32.totalorder %s22, 0
    %p64 = por %p62, %p63
    %p65 = scmp.ne.s32.totalorder %s53, %s54
    %p66 = scmp.eq.s32.totalorder %s23, 1
    %p67 = por %p65, %p66
    %p69 = scmp.ne.s32.totalorder %s54, %s68
    %p70 = scmp.eq.s32.totalorder %s23, 0
    %p71 = por %p69, %p70
    %s73 = sadd.s32 %s72, 1
    %p76 = scmp.eq.s32.totalorder %s17, 1
    %p77 = scmp.ne.s32.totalorder %s72, %s74
    %p78 = scmp.eq.s32.totalorder %s17, 0
    %p79 = por %p77, %p78
    %p80 = scmp.ne.s32.totalorder %s72, %s74
    %p81 = scmp.eq.s32.totalorder %s22, 1
    %p82 = por %p80, %p81
    %p83 = scmp.ne.s32.totalorder %s74, %s75
    %p84 = scmp.eq.s32.totalorder %s22, 0
    %p85 = por %p83, %p84
    %p86 = scmp.ne.s32.totalorder %s74, %s75
    %p87 = scmp.eq.s32.totalorder %s23, 1
    %p88 = por %p86, %p87
    %p90 = scmp.ne.s32.totalorder %s75, %s89
    %p91 = scmp.eq.s32.totalorder %s23, 0
    %p92 = por %p90, %p91
    %s94 = sadd.s32 %s93, 1
    %p97 = scmp.eq.s32.totalorder %s17, 1
    %p98 = scmp.ne.s32.totalorder %s93, %s95
    %p99 = scmp.eq.s32.totalorder %s17, 0
    %p100 = por %p98, %p99
    %p101 = scmp.ne.s32.totalorder %s93, %s95
    %p102 = scmp.eq.s32.totalorder %s22, 1
    %p103 = por %p101, %p102
    %p104 = scmp.ne.s32.totalorder %s95, %s96
    %p105 = scmp.eq.s32.totalorder %s22, 0
    %p106 = por %p104, %p105
    %p107 = scmp.ne.s32.totalorder %s95, %s96
    %p108 = scmp.eq.s32.totalorder %s23, 1
    %p109 = por %p107, %p108
    %p111 = scmp.ne.s32.totalorder %s96, %s110
    %p112 = scmp.eq.s32.totalorder %s23, 0
    %p113 = por %p111, %p112
    %s115 = sadd.s32 %s114, 1
    %p118 = scmp.eq.s32.totalorder %s17, 1
    %p119 = scmp.ne.s32.totalorder %s114, %s116
    %p120 = scmp.eq.s32.totalorder %s17, 0
    %p121 = por %p119, %p120
    %p122 = scmp.ne.s32.totalorder %s114, %s116
    %p123 = scmp.eq.s32.totalorder %s22, 1
    %p124 = por %p122, %p123
    %p125 = scmp.ne.s32.totalorder %s116, %s117
    %p126 = scmp.eq.s32.totalorder %s22, 0
    %p127 = por %p125, %p126
    %p128 = scmp.ne.s32.totalorder %s116, %s117
    %p129 = scmp.eq.s32.totalorder %s23, 1
    %p130 = por %p128, %p129
    %p132 = scmp.ne.s32.totalorder %s117, %s131
    %p133 = scmp.eq.s32.totalorder %s23, 0
    %p134 = por %p132, %p133
    %s136 = sadd.s32 %s135, 1
    %p139 = scmp.eq.s32.totalorder %s17, 1
    %p140 = scmp.ne.s32.totalorder %s135, %s137
    %p141 = scmp.eq.s32.totalorder %s17, 0
    %p142 = por %p140, %p141
    %p143 = scmp.ne.s32.totalorder %s135, %s137
    %p144 = scmp.eq.s32.totalorder %s22, 1
    %p145 = por %p143, %p144
    %p146 = scmp.ne.s32.totalorder %s137, %s138
    %p147 = scmp.eq.s32.totalorder %s22, 0
    %p148 = por %p146, %p147
    %p149 = scmp.ne.s32.totalorder %s137, %s138
    %p150 = scmp.eq.s32.totalorder %s23, 1
    %p151 = por %p149, %p150
    %p153 = scmp.ne.s32.totalorder %s138, %s152
    %p154 = scmp.eq.s32.totalorder %s23, 0
    %p155 = por %p153, %p154
    %s157 = sadd.s32 %s156, 1
    %p160 = scmp.eq.s32.totalorder %s17, 1
    %p161 = scmp.ne.s32.totalorder %s156, %s158
    %p162 = scmp.eq.s32.totalorder %s17, 0
    %p163 = por %p161, %p162
    %p164 = scmp.ne.s32.totalorder %s156, %s158
    %p165 = scmp.eq.s32.totalorder %s22, 1
    %p166 = por %p164, %p165
    %p167 = scmp.ne.s32.totalorder %s158, %s159
    %p168 = scmp.eq.s32.totalorder %s22, 0
    %p169 = por %p167, %p168
    %p170 = scmp.ne.s32.totalorder %s158, %s159
    %p171 = scmp.eq.s32.totalorder %s23, 1
    %p172 = por %p170, %p171
    %p174 = scmp.ne.s32.totalorder %s159, %s173
    %p175 = scmp.eq.s32.totalorder %s23, 0
    %p176 = por %p174, %p175
    %s178 = sadd.s32 %s177, 1
    %p181 = scmp.eq.s32.totalorder %s17, 1
    %p182 = scmp.ne.s32.totalorder %s177, %s179
    %p183 = scmp.eq.s32.totalorder %s17, 0
    %p184 = por %p182, %p183
    %p185 = scmp.ne.s32.totalorder %s177, %s179
    %p186 = scmp.eq.s32.totalorder %s22, 1
    %p187 = por %p185, %p186
    %p188 = scmp.ne.s32.totalorder %s179, %s180
    %p189 = scmp.eq.s32.totalorder %s22, 0
    %p190 = por %p188, %p189
    %p191 = scmp.ne.s32.totalorder %s179, %s180
    %p192 = scmp.eq.s32.totalorder %s23, 1
    %p193 = por %p191, %p192
    %p195 = scmp.ne.s32.totalorder %s180, %s194
    %p196 = scmp.eq.s32.totalorder %s23, 0
    %p197 = por %p195, %p196
    %s199 = sadd.s32 %s198, 1
    %p202 = scmp.eq.s32.totalorder %s17, 1
    %p203 = scmp.ne.s32.totalorder %s198, %s200
    %p204 = scmp.eq.s32.totalorder %s17, 0
    %p205 = por %p203, %p204
    %p206 = scmp.ne.s32.totalorder %s198, %s200
    %p207 = scmp.eq.s32.totalorder %s22, 1
    %p208 = por %p206, %p207
    %p209 = scmp.ne.s32.totalorder %s200, %s201
    %p210 = scmp.eq.s32.totalorder %s22, 0
    %p211 = por %p209, %p210
    %p212 = scmp.ne.s32.totalorder %s200, %s201
    %p213 = scmp.eq.s32.totalorder %s23, 1
    %p214 = por %p212, %p213
    %p216 = scmp.ne.s32.totalorder %s201, %s215
    %p217 = scmp.eq.s32.totalorder %s23, 0
    %p218 = por %p216, %p217
    %s219 = ssub.s32 %s17, %s24
    %p220 = scmp.eq.s32.totalorder %s219, 0
    %s222 = sadd.s32 %s221, 1
    %s223 = scalar_select %p220, %s221, %s222
    %p226 = pneg %p220
    %p227 = scmp.eq.s32.totalorder %s17, 1
    %p228 = por %p226, %p227
    %p229 = scmp.ne.s32.totalorder %s221, %s224
    %p230 = scmp.eq.s32.totalorder %s17, 0
    %p231 = por %p229, %p230
    %p232 = scmp.ne.s32.totalorder %s221, %s224
    %p233 = scmp.eq.s32.totalorder %s22, 1
    %p234 = por %p232, %p233
    %p235 = scmp.ne.s32.totalorder %s224, %s225
    %p236 = scmp.eq.s32.totalorder %s22, 0
    %p237 = por %p235, %p236
    %p238 = scmp.ne.s32.totalorder %s224, %s225
    %p239 = scmp.eq.s32.totalorder %s23, 1
    %p240 = por %p238, %p239
    %p242 = scmp.ne.s32.totalorder %s225, %s241
    %p243 = scmp.eq.s32.totalorder %s23, 0
    %p244 = por %p242, %p243
    %s245 = ssub.s32 %s17, %s24
    %p246 = scmp.eq.s32.totalorder %s245, 0
    %s248 = sadd.s32 %s247, 1
    %s249 = scalar_select %p246, %s247, %s248
    %p252 = pneg %p246
    %p253 = scmp.eq.s32.totalorder %s17, 1
    %p254 = por %p252, %p253
    %p255 = scmp.ne.s32.totalorder %s247, %s250
    %p256 = scmp.eq.s32.totalorder %s17, 0
    %p257 = por %p255, %p256
    %p258 = scmp.ne.s32.totalorder %s247, %s250
    %p259 = scmp.eq.s32.totalorder %s22, 1
    %p260 = por %p258, %p259
    %p261 = scmp.ne.s32.totalorder %s250, %s251
    %p262 = scmp.eq.s32.totalorder %s22, 0
    %p263 = por %p261, %p262
    %p264 = scmp.ne.s32.totalorder %s250, %s251
    %p265 = scmp.eq.s32.totalorder %s23, 1
    %p266 = por %p264, %p265
    %p268 = scmp.ne.s32.totalorder %s251, %s267
    %p269 = scmp.eq.s32.totalorder %s23, 0
    %p270 = por %p268, %p269
    %p271 = scmp.le.s32.totalorder 1, %s17
    %p272 = scmp.lt.s32.totalorder %s17, 3
    %p273 = pnand %p271, %p272
    %p274 = pneg %p273
    // Predicated region
    $region9: #{encoder_forward.1} parent=5 // pred_check
      _
    $region10: #{encoder_forward.1} parent=5 // pred_check_branch
      %276 = sbr.rel (%p273) target = $region12
    $region11: #{encoder_forward.1} parent=5 // pred_region
      %s277 = ssub.s32 %s17, 1
      // Predicated region
      $region13: #{encoder_forward.1} parent=11 // pred_check
        %p278 = pneg %p64
      $region14: #{encoder_forward.1} parent=11 // pred_check_branch
        %280 = sbr.rel (%p278) target = $region16
      $region15: #{encoder_forward.1} parent=11 // pred_region
        _
      $region16: #{encoder_forward.1} parent=11 // pred_fallthru
        _
      // Predicated region
      $region17: #{encoder_forward.1} parent=11 // pred_check
        %p281 = pneg %p85
      $region18: #{encoder_forward.1} parent=11 // pred_check_branch
        %283 = sbr.rel (%p281) target = $region20
      $region19: #{encoder_forward.1} parent=11 // pred_region
        _
      $region20: #{encoder_forward.1} parent=11 // pred_fallthru
        _
      // Predicated region
      $region21: #{encoder_forward.1} parent=11 // pred_check
        %p284 = pneg %p106
      $region22: #{encoder_forward.1} parent=11 // pred_check_branch
        %286 = sbr.rel (%p284) target = $region24
      $region23: #{encoder_forward.1} parent=11 // pred_region
        _
      $region24: #{encoder_forward.1} parent=11 // pred_fallthru
        _
      // Predicated region
      $region25: #{encoder_forward.1} parent=11 // pred_check
        %p287 = pneg %p127
      $region26: #{encoder_forward.1} parent=11 // pred_check_branch
        %289 = sbr.rel (%p287) target = $region28
      $region27: #{encoder_forward.1} parent=11 // pred_region
        _
      $region28: #{encoder_forward.1} parent=11 // pred_fallthru
        _
      // Predicated region
      $region29: #{encoder_forward.1} parent=11 // pred_check
        %p290 = pneg %p148
      $region30: #{encoder_forward.1} parent=11 // pred_check_branch
        %292 = sbr.rel (%p290) target = $region32
      $region31: #{encoder_forward.1} parent=11 // pred_region
        _
      $region32: #{encoder_forward.1} parent=11 // pred_fallthru
        _
      // Predicated region
      $region33: #{encoder_forward.1} parent=11 // pred_check
        %p293 = pneg %p169
      $region34: #{encoder_forward.1} parent=11 // pred_check_branch
        %295 = sbr.rel (%p293) target = $region36
      $region35: #{encoder_forward.1} parent=11 // pred_region
        _
      $region36: #{encoder_forward.1} parent=11 // pred_fallthru
        _
      // Predicated region
      $region37: #{encoder_forward.1} parent=11 // pred_check
        %p296 = pneg %p190
      $region38: #{encoder_forward.1} parent=11 // pred_check_branch
        %298 = sbr.rel (%p296) target = $region40
      $region39: #{encoder_forward.1} parent=11 // pred_region
        _
      $region40: #{encoder_forward.1} parent=11 // pred_fallthru
        _
      // Predicated region
      $region41: #{encoder_forward.1} parent=11 // pred_check
        %p299 = pneg %p211
      $region42: #{encoder_forward.1} parent=11 // pred_check_branch
        %301 = sbr.rel (%p299) target = $region44
      $region43: #{encoder_forward.1} parent=11 // pred_region
        _
      $region44: #{encoder_forward.1} parent=11 // pred_fallthru
        _
    $region12: #{encoder_forward.1} parent=5 // pred_fallthru
      _
    %p302 = scmp.lt.s32.totalorder %s17, 2
    // Predicated region
    $region45: #{encoder_forward.1} parent=5 // pred_check
      %p303 = pneg %p302
    $region46: #{encoder_forward.1} parent=5 // pred_check_branch
      %305 = sbr.rel (%p303) target = $region48
    $region47: #{encoder_forward.1} parent=5 // pred_region
      // Predicated region
      $region49: #{encoder_forward.1} parent=47 // pred_check
        %p306 = pneg %p37
      $region50: #{encoder_forward.1} parent=47 // pred_check_branch
        %308 = sbr.rel (%p306) target = $region52
      $region51: #{encoder_forward.1} parent=47 // pred_region
        %p309 = scmp.lt.s32.totalorder %s17, 1
        %s310 = scalar_select %p309, %s17, 1
        %s311 = smul.addr %s310, 2
        %s312 = smul.addr %s311, 8
        %s313 = scalar_lea.vmem %s0, %s312
      $region52: #{encoder_forward.1} parent=47 // pred_fallthru
        _
    $region48: #{encoder_forward.1} parent=5 // pred_fallthru
      _
    %p314 = scmp.le.s32.totalorder 1, %s17
    %p315 = scmp.lt.s32.totalorder %s17, 3
    %p316 = pnand %p314, %p315
    %p317 = pneg %p316
    // Predicated region
    $region53: #{encoder_forward.1} parent=5 // pred_check
      _
    $region54: #{encoder_forward.1} parent=5 // pred_check_branch
      %319 = sbr.rel (%p316) target = $region56
    $region55: #{encoder_forward.1} parent=5 // pred_region
      %s320 = ssub.s32 %s17, 1
      %p321 = scmp.lt.s32.totalorder %s22, 1
      %s322 = scalar_select %p321, %s22, 1
      %s323 = smul.addr %s322, 2
      %s324 = smul.addr %s323, 8
      %s325 = scalar_lea.vmem %s0, %s324
      %p326 = pneg %p43
      %p327 = pneg %p40
      %p328 = pneg %p64
      %p329 = pneg %p61
      %p330 = pneg %p85
      %p331 = pneg %p82
      %p332 = pneg %p106
      %p333 = pneg %p103
      %p334 = pneg %p127
      %p335 = pneg %p124
      %p336 = pneg %p148
      %p337 = pneg %p145
      %p338 = pneg %p169
      %p339 = pneg %p166
      %p340 = pneg %p190
      %p341 = pneg %p187
      %p342 = pneg %p211
      %p343 = pneg %p208
      %p344 = pneg %p237
      %p345 = pneg %p234
      %p346 = scmp.lt.s32.totalorder %s22, 1
      %s347 = scalar_select %p346, %s22, 1
      %s348 = smul.addr %s347, 4
      %s349 = scalar_lea.vmem %s9, %s348
      %p350 = pneg %p263
      %p351 = pneg %p260
      %p352 = scmp.lt.s32.totalorder %s22, 1
      %s353 = scalar_select %p352, %s22, 1
      %s354 = smul.addr %s353, 2
      %s355 = smul.addr %s354, 8
      %s356 = scalar_lea.vmem %s10, %s355
      %p357 = scmp.lt.s32.totalorder %s22, 1
      %s358 = scalar_select %p357, %s22, 1
      %s359 = smul.addr %s358, 2
      %s360 = smul.addr %s359, 8
      %s361 = scalar_lea.vmem %s0, %s360
      %p362 = scmp.lt.s32.totalorder %s22, 1
      %s363 = scalar_select %p362, %s22, 1
      %s364 = smul.addr %s363, 4
      %s365 = scalar_lea.vmem %s9, %s364
      %p366 = scmp.lt.s32.totalorder %s22, 1
      %s367 = scalar_select %p366, %s22, 1
      %s368 = smul.addr %s367, 2
      %s369 = smul.addr %s368, 8
      %s370 = scalar_lea.vmem %s10, %s369
      %v372 = vld [vmem:[%s361] sm:$0xff]
      %v373 = vld [vmem:[%s361 + $0x8] sm:$0xff]
      %v374 = vld [vmem:[%s1] sm:$0xff]
      %v375 = vld [vmem:[%s1 + $0x8] sm:$0xff]
      %v376 = vld [vmem:[%s1 + $0x10] sm:$0xff]
      %v377 = vld [vmem:[%s1 + $0x18] sm:$0xff]
      %v378 = vpack.c.bf16 %v373, %v372
      %v379 = vpack.c.bf16 %v375, %v374
      %v380 = vpack.c.bf16 %v377, %v376
      %v381 = vld [vmem:[%s2] sm:$0x1]
      %v383 = vlaneseq
      %v384 = vshrl.u32 %v383, 7
      %v385 = vsub.s32 0, %v384
      %v386 = vrot.slane %v381, %v385
      %vm388 = vcmask 261120
      %v390 = vsel %vm388, %v378, 0
      %392 = vmatprep.subr.bf16.mxu0 0
      %393 = vmatpush1.bf16.msra.mxu0 %v379
      %394 = vmatprep.subr.bf16.mxu0 0
      %395 = vmatpush1.bf16.msra.mxu0 %v380
      %396 = vmatprep.subr.bf16.mxu0 0
      %397 = vmatpush1.bf16.msra.mxu0 0
      %398 = vmatprep.subr.bf16.mxu0 0
      %399 = vmatpush1.bf16.msra.mxu0 0
      %400 = vmatprep.subr.bf16.mxu0 0
      %401 = vmatpush1.bf16.msra.mxu0 0
      %402 = vmatprep.subr.bf16.mxu0 0
      %403 = vmatpush1.bf16.msra.mxu0 0
      %404 = vmatprep.subr.bf16.mxu0 0
      %405 = vmatpush1.bf16.msra.mxu0 0
      %406 = vmatprep.subr.bf16.mxu0 0
      %407 = vmatpush1.bf16.msra.mxu0 0
      %408 = vmatprep.subr.bf16.mxu0 0
      %409 = vmatpush1.bf16.msra.mxu0 0
      %410 = vmatprep.subr.bf16.mxu0 0
      %411 = vmatpush1.bf16.msra.mxu0 0
      %412 = vmatprep.subr.bf16.mxu0 0
      %413 = vmatpush1.bf16.msra.mxu0 0
      %414 = vmatprep.subr.bf16.mxu0 0
      %415 = vmatpush1.bf16.msra.mxu0 0
      %416 = vmatprep.subr.bf16.mxu0 0
      %417 = vmatpush1.bf16.msra.mxu0 0
      %418 = vmatprep.subr.bf16.mxu0 0
      %419 = vmatpush1.bf16.msra.mxu0 0
      %420 = vmatprep.subr.bf16.mxu0 0
      %421 = vmatpush1.bf16.msra.mxu0 0
      %422 = vmatprep.subr.bf16.mxu0 0
      %423 = vmatpush1.bf16.msra.mxu0 0
      %424 = vmatprep.mubr.bf16.mxu0 0
      %425 = vmatmul.mubr.bf16.gmra.mrb[0].mxu0 %v390
      %v426 = vpop.f32.mrb[0].mxu0
      %v427 = vadd.f32 %v386, %v426
      %v428 = vpop.f32.mrb[0].mxu0
      %v429 = vpop.f32.mrb[0].mxu0
      %v430 = vadd.f32 %v386, %v429
      %v431 = vpop.f32.mrb[0].mxu0
      %432 = vdwg.mxu0
      %v433 = vpack.c.bf16 %v430, %v427
      %435 = vrot.lane.b32.xlu0 %v433, 96
      %v436 = vpop.permute.xlu0 %435
      %vm437 = vcmask 64512
      %v439 = vsel %vm437, %v433, 0
      %v442 = vsel %vm437, %v436, 0
      %444 = vmatprep.subr.bf16.mxu0 0
      %445 = vmatpush1.bf16.xpose.msra.mxu0 %v442
      %446 = vmatprep.subr.bf16.mxu0 0
      %447 = vmatpush1.bf16.xpose.msra.mxu0 0
      %448 = vmatprep.subr.bf16.mxu0 0
      %449 = vmatpush1.bf16.xpose.msra.mxu0 0
      %450 = vmatprep.subr.bf16.mxu0 0
      %451 = vmatpush1.bf16.xpose.msra.mxu0 0
      %452 = vmatprep.subr.bf16.mxu0 0
      %453 = vmatpush1.bf16.xpose.msra.mxu0 0
      %454 = vmatprep.subr.bf16.mxu0 0
      %455 = vmatpush1.bf16.xpose.msra.mxu0 0
      %456 = vmatprep.subr.bf16.mxu0 0
      %457 = vmatpush1.bf16.xpose.msra.mxu0 0
      %458 = vmatprep.subr.bf16.mxu0 0
      %459 = vmatpush1.bf16.xpose.msra.mxu0 0
      %460 = vmatprep.subr.bf16.mxu0 0
      %461 = vmatpush1.bf16.xpose.msra.mxu0 0
      %462 = vmatprep.subr.bf16.mxu0 0
      %463 = vmatpush1.bf16.xpose.msra.mxu0 0
      %464 = vmatprep.subr.bf16.mxu0 0
      %465 = vmatpush1.bf16.xpose.msra.mxu0 0
      %466 = vmatprep.subr.bf16.mxu0 0
      %467 = vmatpush1.bf16.xpose.msra.mxu0 0
      %468 = vmatprep.subr.bf16.mxu0 0
      %469 = vmatpush1.bf16.xpose.msra.mxu0 0
      %470 = vmatprep.subr.bf16.mxu0 0
      %471 = vmatpush1.bf16.xpose.msra.mxu0 0
      %472 = vmatprep.subr.bf16.mxu0 0
      %473 = vmatpush1.bf16.xpose.msra.mxu0 0
      %474 = vmatprep.subr.bf16.mxu0 0
      %475 = vmatpush1.bf16.xpose.msra.mxu0 0
      %476 = vmatprep.mubr.bf16.mxu0 0
      %477 = vmatmul.mubr.bf16.gmra.mrb[0].mxu0 %v439
      %v478 = vpop.f32.mrb[0].mxu0
      %v479 = vadd.f32 0.0, %v478
      %v480 = vpop.f32.mrb[0].mxu0
      %v481 = vpop.f32.mrb[0].mxu0
      %v482 = vadd.f32 0.0, %v481
      %v483 = vpop.f32.mrb[0].mxu0
      %484 = vdwg.mxu0
      %vm485 = vcmask 130048
      %v486 = vsel %vm485, %v479, -inf
      %487 = vmax.xlane.f32.xlu0 %v486
      %v488 = vpop.xlane.xlu0 %487
      %v489 = vsel %vm485, %v482, -inf
      %490 = vmax.xlane.f32.xlu0 %v489
      %v491 = vpop.xlane.xlu0 %490
      %v492 = vsub.f32 %v479, %v488
      %v493 = vsub.f32 %v482, %v491
      %v494 = vmul.f32 %v492, 1.442695
      %v495 = vpow.pop %v494
      %v496 = vmul.f32 %v493, 1.442695
      %v497 = vpow.pop %v496
      %v498 = vsel %vm485, %v495, 0.0
      %499 = vadd.xlane.f32.xlu0 %v498
      %v500 = vpop.xlane.xlu0 %499
      %v501 = vsel %vm485, %v497, 0.0
      %502 = vadd.xlane.f32.xlu0 %v501
      %v503 = vpop.xlane.xlu0 %502
      %v504 = vrcp.pop %v500
      %v505 = vrcp.pop %v503
      %v506 = vmul.f32 %v495, %v504
      %v507 = vmul.f32 %v497, %v505
      %v508 = vpack.c.bf16 %v507, %v506
      %509 = vrot.lane.b32.xlu0 %v433, 64
      %v510 = vpop.permute.xlu0 %509
      %v513 = vsel %vm485, %v508, 0
      %515 = vmatprep.subr.bf16.mxu0 0
      %516 = vmatpush1.bf16.msra.mxu0 %v510
      %517 = vmatprep.subr.bf16.mxu0 0
      %518 = vmatpush1.bf16.msra.mxu0 0
      %519 = vmatprep.subr.bf16.mxu0 0
      %520 = vmatpush1.bf16.msra.mxu0 0
      %521 = vmatprep.subr.bf16.mxu0 0
      %522 = vmatpush1.bf16.msra.mxu0 0
      %523 = vmatprep.subr.bf16.mxu0 0
      %524 = vmatpush1.bf16.msra.mxu0 0
      %525 = vmatprep.subr.bf16.mxu0 0
      %526 = vmatpush1.bf16.msra.mxu0 0
      %527 = vmatprep.subr.bf16.mxu0 0
      %528 = vmatpush1.bf16.msra.mxu0 0
      %529 = vmatprep.subr.bf16.mxu0 0
      %530 = vmatpush1.bf16.msra.mxu0 0
      %531 = vmatprep.subr.bf16.mxu0 0
      %532 = vmatpush1.bf16.msra.mxu0 0
      %533 = vmatprep.subr.bf16.mxu0 0
      %534 = vmatpush1.bf16.msra.mxu0 0
      %535 = vmatprep.subr.bf16.mxu0 0
      %536 = vmatpush1.bf16.msra.mxu0 0
      %537 = vmatprep.subr.bf16.mxu0 0
      %538 = vmatpush1.bf16.msra.mxu0 0
      %539 = vmatprep.subr.bf16.mxu0 0
      %540 = vmatpush1.bf16.msra.mxu0 0
      %541 = vmatprep.subr.bf16.mxu0 0
      %542 = vmatpush1.bf16.msra.mxu0 0
      %543 = vmatprep.subr.bf16.mxu0 0
      %544 = vmatpush1.bf16.msra.mxu0 0
      %545 = vmatprep.subr.bf16.mxu0 0
      %546 = vmatpush1.bf16.msra.mxu0 0
      %547 = vmatprep.mubr.bf16.mxu0 0
      %548 = vmatmul.mubr.bf16.gmra.mrb[0].mxu0 %v513
      %v549 = vpop.f32.mrb[0].mxu0
      %v550 = vadd.f32 0.0, %v549
      %v551 = vpop.f32.mrb[0].mxu0
      %v552 = vpop.f32.mrb[0].mxu0
      %v553 = vadd.f32 0.0, %v552
      %v554 = vpop.f32.mrb[0].mxu0
      %555 = vdwg.mxu0
      %556 = vrot.lane.b32.xlu0 %v433, 120
      %v557 = vpop.permute.xlu0 %556
      %558 = vrot.lane.b32.xlu0 %v433, 88
      %v559 = vpop.permute.xlu0 %558
      %v561 = vsel %vm437, %v557, 0
      %v564 = vsel %vm437, %v559, 0
      %566 = vmatprep.subr.bf16.mxu0 0
      %567 = vmatpush1.bf16.xpose.msra.mxu0 %v564
      %568 = vmatprep.subr.bf16.mxu0 0
      %569 = vmatpush1.bf16.xpose.msra.mxu0 0
      %570 = vmatprep.subr.bf16.mxu0 0
      %571 = vmatpush1.bf16.xpose.msra.mxu0 0
      %572 = vmatprep.subr.bf16.mxu0 0
      %573 = vmatpush1.bf16.xpose.msra.mxu0 0
      %574 = vmatprep.subr.bf16.mxu0 0
      %575 = vmatpush1.bf16.xpose.msra.mxu0 0
      %576 = vmatprep.subr.bf16.mxu0 0
      %577 = vmatpush1.bf16.xpose.msra.mxu0 0
      %578 = vmatprep.subr.bf16.mxu0 0
      %579 = vmatpush1.bf16.xpose.msra.mxu0 0
      %580 = vmatprep.subr.bf16.mxu0 0
      %581 = vmatpush1.bf16.xpose.msra.mxu0 0
      %582 = vmatprep.subr.bf16.mxu0 0
      %583 = vmatpush1.bf16.xpose.msra.mxu0 0
      %584 = vmatprep.subr.bf16.mxu0 0
      %585 = vmatpush1.bf16.xpose.msra.mxu0 0
      %586 = vmatprep.subr.bf16.mxu0 0
      %587 = vmatpush1.bf16.xpose.msra.mxu0 0
      %588 = vmatprep.subr.bf16.mxu0 0
      %589 = vmatpush1.bf16.xpose.msra.mxu0 0
      %590 = vmatprep.subr.bf16.mxu0 0
      %591 = vmatpush1.bf16.xpose.msra.mxu0 0
      %592 = vmatprep.subr.bf16.mxu0 0
      %593 = vmatpush1.bf16.xpose.msra.mxu0 0
      %594 = vmatprep.subr.bf16.mxu0 0
      %595 = vmatpush1.bf16.xpose.msra.mxu0 0
      %596 = vmatprep.subr.bf16.mxu0 0
      %597 = vmatpush1.bf16.xpose.msra.mxu0 0
      %598 = vmatprep.mubr.bf16.mxu0 0
      %599 = vmatmul.mubr.bf16.gmra.mrb[0].mxu0 %v561
      %v600 = vpop.f32.mrb[0].mxu0
      %v601 = vadd.f32 0.0, %v600
      %v602 = vpop.f32.mrb[0].mxu0
      %v603 = vpop.f32.mrb[0].mxu0
      %v604 = vadd.f32 0.0, %v603
      %v605 = vpop.f32.mrb[0].mxu0
      %606 = vdwg.mxu0
      %v607 = vsel %vm485, %v601, -inf
      %608 = vmax.xlane.f32.xlu0 %v607
      %v609 = vpop.xlane.xlu0 %608
      %v610 = vsel %vm485, %v604, -inf
      %611 = vmax.xlane.f32.xlu0 %v610
      %v612 = vpop.xlane.xlu0 %611
      %v613 = vsub.f32 %v601, %v609
      %v614 = vsub.f32 %v604, %v612
      %v615 = vmul.f32 %v613, 1.442695
      %v616 = vpow.pop %v615
      %v617 = vmul.f32 %v614, 1.442695
      %v618 = vpow.pop %v617
      %v619 = vsel %vm485, %v616, 0.0
      %620 = vadd.xlane.f32.xlu0 %v619
      %v621 = vpop.xlane.xlu0 %620
      %v622 = vsel %vm485, %v618, 0.0
      %623 = vadd.xlane.f32.xlu0 %v622
      %v624 = vpop.xlane.xlu0 %623
      %v625 = vrcp.pop %v621
      %v626 = vrcp.pop %v624
      %v627 = vmul.f32 %v616, %v625
      %v628 = vmul.f32 %v618, %v626
      %v629 = vpack.c.bf16 %v628, %v627
      %630 = vrot.lane.b32.xlu0 %v433, 56
      %v631 = vpop.permute.xlu0 %630
      %v634 = vsel %vm485, %v629, 0
      %636 = vmatprep.subr.bf16.mxu0 0
      %637 = vmatpush1.bf16.msra.mxu0 %v631
      %638 = vmatprep.subr.bf16.mxu0 0
      %639 = vmatpush1.bf16.msra.mxu0 0
      %640 = vmatprep.subr.bf16.mxu0 0
      %641 = vmatpush1.bf16.msra.mxu0 0
      %642 = vmatprep.subr.bf16.mxu0 0
      %643 = vmatpush1.bf16.msra.mxu0 0
      %644 = vmatprep.subr.bf16.mxu0 0
      %645 = vmatpush1.bf16.msra.mxu0 0
      %646 = vmatprep.subr.bf16.mxu0 0
      %647 = vmatpush1.bf16.msra.mxu0 0
      %648 = vmatprep.subr.bf16.mxu0 0
      %649 = vmatpush1.bf16.msra.mxu0 0
      %650 = vmatprep.subr.bf16.mxu0 0
      %651 = vmatpush1.bf16.msra.mxu0 0
      %652 = vmatprep.subr.bf16.mxu0 0
      %653 = vmatpush1.bf16.msra.mxu0 0
      %654 = vmatprep.subr.bf16.mxu0 0
      %655 = vmatpush1.bf16.msra.mxu0 0
      %656 = vmatprep.subr.bf16.mxu0 0
      %657 = vmatpush1.bf16.msra.mxu0 0
      %658 = vmatprep.subr.bf16.mxu0 0
      %659 = vmatpush1.bf16.msra.mxu0 0
      %660 = vmatprep.subr.bf16.mxu0 0
      %661 = vmatpush1.bf16.msra.mxu0 0
      %662 = vmatprep.subr.bf16.mxu0 0
      %663 = vmatpush1.bf16.msra.mxu0 0
      %664 = vmatprep.subr.bf16.mxu0 0
      %665 = vmatpush1.bf16.msra.mxu0 0
      %666 = vmatprep.subr.bf16.mxu0 0
      %667 = vmatpush1.bf16.msra.mxu0 0
      %668 = vmatprep.mubr.bf16.mxu0 0
      %669 = vmatmul.mubr.bf16.gmra.mrb[0].mxu0 %v634
      %v670 = vpop.f32.mrb[0].mxu0
      %v671 = vadd.f32 0.0, %v670
      %v672 = vpop.f32.mrb[0].mxu0
      %v673 = vpop.f32.mrb[0].mxu0
      %v674 = vadd.f32 0.0, %v673
      %v675 = vpop.f32.mrb[0].mxu0
      %676 = vdwg.mxu0
      %677 = vrot.lane.b32.xlu0 %v433, 112
      %v678 = vpop.permute.xlu0 %677
      %679 = vrot.lane.b32.xlu0 %v433, 80
      %v680 = vpop.permute.xlu0 %679
      %v682 = vsel %vm437, %v678, 0
      %v685 = vsel %vm437, %v680, 0
      %687 = vmatprep.subr.bf16.mxu0 0
      %688 = vmatpush1.bf16.xpose.msra.mxu0 %v685
      %689 = vmatprep.subr.bf16.mxu0 0
      %690 = vmatpush1.bf16.xpose.msra.mxu0 0
      %691 = vmatprep.subr.bf16.mxu0 0
      %692 = vmatpush1.bf16.xpose.msra.mxu0 0
      %693 = vmatprep.subr.bf16.mxu0 0
      %694 = vmatpush1.bf16.xpose.msra.mxu0 0
      %695 = vmatprep.subr.bf16.mxu0 0
      %696 = vmatpush1.bf16.xpose.msra.mxu0 0
      %697 = vmatprep.subr.bf16.mxu0 0
      %698 = vmatpush1.bf16.xpose.msra.mxu0 0
      %699 = vmatprep.subr.bf16.mxu0 0
      %700 = vmatpush1.bf16.xpose.msra.mxu0 0
      %701 = vmatprep.subr.bf16.mxu0 0
      %702 = vmatpush1.bf16.xpose.msra.mxu0 0
      %703 = vmatprep.subr.bf16.mxu0 0
      %704 = vmatpush1.bf16.xpose.msra.mxu0 0
      %705 = vmatprep.subr.bf16.mxu0 0
      %706 = vmatpush1.bf16.xpose.msra.mxu0 0
      %707 = vmatprep.subr.bf16.mxu0 0
      %708 = vmatpush1.bf16.xpose.msra.mxu0 0
      %709 = vmatprep.subr.bf16.mxu0 0
      %710 = vmatpush1.bf16.xpose.msra.mxu0 0
      %711 = vmatprep.subr.bf16.mxu0 0
      %712 = vmatpush1.bf16.xpose.msra.mxu0 0
      %713 = vmatprep.subr.bf16.mxu0 0
      %714 = vmatpush1.bf16.xpose.msra.mxu0 0
      %715 = vmatprep.subr.bf16.mxu0 0
      %716 = vmatpush1.bf16.xpose.msra.mxu0 0
      %717 = vmatprep.subr.bf16.mxu0 0
      %718 = vmatpush1.bf16.xpose.msra.mxu0 0
      %719 = vmatprep.mubr.bf16.mxu0 0
      %720 = vmatmul.mubr.bf16.gmra.mrb[0].mxu0 %v682
      %v721 = vpop.f32.mrb[0].mxu0
      %v722 = vadd.f32 0.0, %v721
      %v723 = vpop.f32.mrb[0].mxu0
      %v724 = vpop.f32.mrb[0].mxu0
      %v725 = vadd.f32 0.0, %v724
      %v726 = vpop.f32.mrb[0].mxu0
      %727 = vdwg.mxu0
      %v728 = vsel %vm485, %v722, -inf
      %729 = vmax.xlane.f32.xlu0 %v728
      %v730 = vpop.xlane.xlu0 %729
      %v731 = vsel %vm485, %v725, -inf
      %732 = vmax.xlane.f32.xlu0 %v731
      %v733 = vpop.xlane.xlu0 %732
      %v734 = vsub.f32 %v722, %v730
      %v735 = vsub.f32 %v725, %v733
      %v736 = vmul.f32 %v734, 1.442695
      %v737 = vpow.pop %v736
      %v738 = vmul.f32 %v735, 1.442695
      %v739 = vpow.pop %v738
      %v740 = vsel %vm485, %v737, 0.0
      %741 = vadd.xlane.f32.xlu0 %v740
      %v742 = vpop.xlane.xlu0 %741
      %v743 = vsel %vm485, %v739, 0.0
      %744 = vadd.xlane.f32.xlu0 %v743
      %v745 = vpop.xlane.xlu0 %744
      %v746 = vrcp.pop %v742
      %v747 = vrcp.pop %v745
      %v748 = vmul.f32 %v737, %v746
      %v749 = vmul.f32 %v739, %v747
      %v750 = vpack.c.bf16 %v749, %v748
      %751 = vrot.lane.b32.xlu0 %v433, 48
      %v752 = vpop.permute.xlu0 %751
      %v755 = vsel %vm485, %v750, 0
      %757 = vmatprep.subr.bf16.mxu0 0
      %758 = vmatpush1.bf16.msra.mxu0 %v752
      %759 = vmatprep.subr.bf16.mxu0 0
      %760 = vmatpush1.bf16.msra.mxu0 0
      %761 = vmatprep.subr.bf16.mxu0 0
      %762 = vmatpush1.bf16.msra.mxu0 0
      %763 = vmatprep.subr.bf16.mxu0 0
      %764 = vmatpush1.bf16.msra.mxu0 0
      %765 = vmatprep.subr.bf16.mxu0 0
      %766 = vmatpush1.bf16.msra.mxu0 0
      %767 = vmatprep.subr.bf16.mxu0 0
      %768 = vmatpush1.bf16.msra.mxu0 0
      %769 = vmatprep.subr.bf16.mxu0 0
      %770 = vmatpush1.bf16.msra.mxu0 0
      %771 = vmatprep.subr.bf16.mxu0 0
      %772 = vmatpush1.bf16.msra.mxu0 0
      %773 = vmatprep.subr.bf16.mxu0 0
      %774 = vmatpush1.bf16.msra.mxu0 0
      %775 = vmatprep.subr.bf16.mxu0 0
      %776 = vmatpush1.bf16.msra.mxu0 0
      %777 = vmatprep.subr.bf16.mxu0 0
      %778 = vmatpush1.bf16.msra.mxu0 0
      %779 = vmatprep.subr.bf16.mxu0 0
      %780 = vmatpush1.bf16.msra.mxu0 0
      %781 = vmatprep.subr.bf16.mxu0 0
      %782 = vmatpush1.bf16.msra.mxu0 0
      %783 = vmatprep.subr.bf16.mxu0 0
      %784 = vmatpush1.bf16.msra.mxu0 0
      %785 = vmatprep.subr.bf16.mxu0 0
      %786 = vmatpush1.bf16.msra.mxu0 0
      %787 = vmatprep.subr.bf16.mxu0 0
      %788 = vmatpush1.bf16.msra.mxu0 0
      %789 = vmatprep.mubr.bf16.mxu0 0
      %790 = vmatmul.mubr.bf16.gmra.mrb[0].mxu0 %v755
      %v791 = vpop.f32.mrb[0].mxu0
      %v792 = vadd.f32 0.0, %v791
      %v793 = vpop.f32.mrb[0].mxu0
      %v794 = vpop.f32.mrb[0].mxu0
      %v795 = vadd.f32 0.0, %v794
      %v796 = vpop.f32.mrb[0].mxu0
      %797 = vdwg.mxu0
      %798 = vrot.lane.b32.xlu0 %v433, 104
      %v799 = vpop.permute.xlu0 %798
      %800 = vrot.lane.b32.xlu0 %v433, 72
      %v801 = vpop.permute.xlu0 %800
      %v803 = vsel %vm437, %v799, 0
      %v806 = vsel %vm437, %v801, 0
      %808 = vmatprep.subr.bf16.mxu0 0
      %809 = vmatpush1.bf16.xpose.msra.mxu0 %v806
      %810 = vmatprep.subr.bf16.mxu0 0
      %811 = vmatpush1.bf16.xpose.msra.mxu0 0
      %812 = vmatprep.subr.bf16.mxu0 0
      %813 = vmatpush1.bf16.xpose.msra.mxu0 0
      %814 = vmatprep.subr.bf16.mxu0 0
      %815 = vmatpush1.bf16.xpose.msra.mxu0 0
      %816 = vmatprep.subr.bf16.mxu0 0
      %817 = vmatpush1.bf16.xpose.msra.mxu0 0
      %818 = vmatprep.subr.bf16.mxu0 0
      %819 = vmatpush1.bf16.xpose.msra.mxu0 0
      %820 = vmatprep.subr.bf16.mxu0 0
      %821 = vmatpush1.bf16.xpose.msra.mxu0 0
      %822 = vmatprep.subr.bf16.mxu0 0
      %823 = vmatpush1.bf16.xpose.msra.mxu0 0
      %824 = vmatprep.subr.bf16.mxu0 0
      %825 = vmatpush1.bf16.xpose.msra.mxu0 0
      %826 = vmatprep.subr.bf16.mxu0 0
      %827 = vmatpush1.bf16.xpose.msra.mxu0 0
      %828 = vmatprep.subr.bf16.mxu0 0
      %829 = vmatpush1.bf16.xpose.msra.mxu0 0
      %830 = vmatprep.subr.bf16.mxu0 0
      %831 = vmatpush1.bf16.xpose.msra.mxu0 0
      %832 = vmatprep.subr.bf16.mxu0 0
      %833 = vmatpush1.bf16.xpose.msra.mxu0 0
      %834 = vmatprep.subr.bf16.mxu0 0
      %835 = vmatpush1.bf16.xpose.msra.mxu0 0
      %836 = vmatprep.subr.bf16.mxu0 0
      %837 = vmatpush1.bf16.xpose.msra.mxu0 0
      %838 = vmatprep.subr.bf16.mxu0 0
      %839 = vmatpush1.bf16.xpose.msra.mxu0 0
      %840 = vmatprep.mubr.bf16.mxu0 0
      %841 = vmatmul.mubr.bf16.gmra.mrb[0].mxu0 %v803
      %v842 = vpop.f32.mrb[0].mxu0
      %v843 = vadd.f32 0.0, %v842
      %v844 = vpop.f32.mrb[0].mxu0
      %v845 = vpop.f32.mrb[0].mxu0
      %v846 = vadd.f32 0.0, %v845
      %v847 = vpop.f32.mrb[0].mxu0
      %848 = vdwg.mxu0
      %v849 = vsel %vm485, %v843, -inf
      %850 = vmax.xlane.f32.xlu0 %v849
      %v851 = vpop.xlane.xlu0 %850
      %v852 = vsel %vm485, %v846, -inf
      %853 = vmax.xlane.f32.xlu0 %v852
      %v854 = vpop.xlane.xlu0 %853
      %v855 = vsub.f32 %v843, %v851
      %v856 = vsub.f32 %v846, %v854
      %v857 = vmul.f32 %v855, 1.442695
      %v858 = vpow.pop %v857
      %v859 = vmul.f32 %v856, 1.442695
      %v860 = vpow.pop %v859
      %v861 = vsel %vm485, %v858, 0.0
      %862 = vadd.xlane.f32.xlu0 %v861
      %v863 = vpop.xlane.xlu0 %862
      %v864 = vsel %vm485, %v860, 0.0
      %865 = vadd.xlane.f32.xlu0 %v864
      %v866 = vpop.xlane.xlu0 %865
      %v867 = vrcp.pop %v863
      %v868 = vrcp.pop %v866
      %v869 = vmul.f32 %v858, %v867
      %v870 = vmul.f32 %v860, %v868
      %v871 = vpack.c.bf16 %v870, %v869
      %872 = vrot.lane.b32.xlu0 %v433, 40
      %v873 = vpop.permute.xlu0 %872
      %v876 = vsel %vm485, %v871, 0
      %878 = vmatprep.subr.bf16.mxu0 0
      %879 = vmatpush1.bf16.msra.mxu0 %v873
      %880 = vmatprep.subr.bf16.mxu0 0
      %881 = vmatpush1.bf16.msra.mxu0 0
      %882 = vmatprep.subr.bf16.mxu0 0
      %883 = vmatpush1.bf16.msra.mxu0 0
      %884 = vmatprep.subr.bf16.mxu0 0
      %885 = vmatpush1.bf16.msra.mxu0 0
      %886 = vmatprep.subr.bf16.mxu0 0
      %887 = vmatpush1.bf16.msra.mxu0 0
      %888 = vmatprep.subr.bf16.mxu0 0
      %889 = vmatpush1.bf16.msra.mxu0 0
      %890 = vmatprep.subr.bf16.mxu0 0
      %891 = vmatpush1.bf16.msra.mxu0 0
      %892 = vmatprep.subr.bf16.mxu0 0
      %893 = vmatpush1.bf16.msra.mxu0 0
      %894 = vmatprep.subr.bf16.mxu0 0
      %895 = vmatpush1.bf16.msra.mxu0 0
      %896 = vmatprep.subr.bf16.mxu0 0
      %897 = vmatpush1.bf16.msra.mxu0 0
      %898 = vmatprep.subr.bf16.mxu0 0
      %899 = vmatpush1.bf16.msra.mxu0 0
      %900 = vmatprep.subr.bf16.mxu0 0
      %901 = vmatpush1.bf16.msra.mxu0 0
      %902 = vmatprep.subr.bf16.mxu0 0
      %903 = vmatpush1.bf16.msra.mxu0 0
      %904 = vmatprep.subr.bf16.mxu0 0
      %905 = vmatpush1.bf16.msra.mxu0 0
      %906 = vmatprep.subr.bf16.mxu0 0
      %907 = vmatpush1.bf16.msra.mxu0 0
      %908 = vmatprep.subr.bf16.mxu0 0
      %909 = vmatpush1.bf16.msra.mxu0 0
      %910 = vmatprep.mubr.bf16.mxu0 0
      %911 = vmatmul.mubr.bf16.gmra.mrb[0].mxu0 %v876
      %v912 = vpop.f32.mrb[0].mxu0
      %v913 = vadd.f32 0.0, %v912
      %v914 = vpop.f32.mrb[0].mxu0
      %v915 = vpop.f32.mrb[0].mxu0
      %v916 = vadd.f32 0.0, %v915
      %v917 = vpop.f32.mrb[0].mxu0
      %918 = vdwg.mxu0
      %921 = vrot.lane.b32.xlu0 %v671, 8
      %v922 = vpop.permute.xlu0 %921
      %923 = vrot.lane.b32.xlu0 %v674, 8
      %v924 = vpop.permute.xlu0 %923
      %929 = vrot.lane.b32.xlu0 %v792, 16
      %v930 = vpop.permute.xlu0 %929
      %931 = vrot.lane.b32.xlu0 %v795, 16
      %v932 = vpop.permute.xlu0 %931
      %937 = vrot.lane.b32.xlu0 %v913, 24
      %v938 = vpop.permute.xlu0 %937
      %939 = vrot.lane.b32.xlu0 %v916, 24
      %v940 = vpop.permute.xlu0 %939
      %v943 = vsel %vm437, %v550, %v922
      %v944 = vsel %vm437, %v553, %v924
      %v945 = vsel %vm485, %v943, %v930
      %v946 = vsel %vm485, %v944, %v932
      %vm947 = vcmask 195584
      %v948 = vsel %vm947, %v945, %v938
      %v949 = vsel %vm947, %v946, %v940
      %v950 = vld [vmem:[%s3] sm:$0xff]
      %v951 = vld [vmem:[%s3 + $0x8] sm:$0xff]
      %v952 = vld [vmem:[%s3 + $0x10] sm:$0xff]
      %v953 = vld [vmem:[%s3 + $0x18] sm:$0xff]
      %v954 = vpack.c.bf16 %v949, %v948
      %v955 = vpack.c.bf16 %v951, %v950
      %v956 = vpack.c.bf16 %v953, %v952
      %v957 = vld [vmem:[%s4] sm:$0x1]
      %v959 = vlaneseq
      %v960 = vshrl.u32 %v959, 7
      %v961 = vsub.s32 0, %v960
      %v962 = vrot.slane %v957, %v961
      %v965 = vsel %vm388, %v954, 0
      %967 = vmatprep.subr.bf16.mxu0 0
      %968 = vmatpush1.bf16.msra.mxu0 %v955
      %969 = vmatprep.subr.bf16.mxu0 0
      %970 = vmatpush1.bf16.msra.mxu0 %v956
      %971 = vmatprep.subr.bf16.mxu0 0
      %972 = vmatpush1.bf16.msra.mxu0 0
      %973 = vmatprep.subr.bf16.mxu0 0
      %974 = vmatpush1.bf16.msra.mxu0 0
      %975 = vmatprep.subr.bf16.mxu0 0
      %976 = vmatpush1.bf16.msra.mxu0 0
      %977 = vmatprep.subr.bf16.mxu0 0
      %978 = vmatpush1.bf16.msra.mxu0 0
      %979 = vmatprep.subr.bf16.mxu0 0
      %980 = vmatpush1.bf16.msra.mxu0 0
      %981 = vmatprep.subr.bf16.mxu0 0
      %982 = vmatpush1.bf16.msra.mxu0 0
      %983 = vmatprep.subr.bf16.mxu0 0
      %984 = vmatpush1.bf16.msra.mxu0 0
      %985 = vmatprep.subr.bf16.mxu0 0
      %986 = vmatpush1.bf16.msra.mxu0 0
      %987 = vmatprep.subr.bf16.mxu0 0
      %988 = vmatpush1.bf16.msra.mxu0 0
      %989 = vmatprep.subr.bf16.mxu0 0
      %990 = vmatpush1.bf16.msra.mxu0 0
      %991 = vmatprep.subr.bf16.mxu0 0
      %992 = vmatpush1.bf16.msra.mxu0 0
      %993 = vmatprep.subr.bf16.mxu0 0
      %994 = vmatpush1.bf16.msra.mxu0 0
      %995 = vmatprep.subr.bf16.mxu0 0
      %996 = vmatpush1.bf16.msra.mxu0 0
      %997 = vmatprep.subr.bf16.mxu0 0
      %998 = vmatpush1.bf16.msra.mxu0 0
      %999 = vmatprep.mubr.bf16.mxu0 0
      %1000 = vmatmul.mubr.bf16.gmra.mrb[0].mxu0 %v965
      %v1001 = vpop.f32.mrb[0].mxu0
      %v1002 = vadd.f32 %v962, %v1001
      %v1003 = vpop.f32.mrb[0].mxu0
      %v1004 = vpop.f32.mrb[0].mxu0
      %v1005 = vadd.f32 %v962, %v1004
      %v1006 = vpop.f32.mrb[0].mxu0
      %1007 = vdwg.mxu0
      %v1008 = vadd.f32 %v372, %v1002
      %v1009 = vadd.f32 %v373, %v1005
      %v1010 = vlaneseq
      %v1011 = vshrl.u32 %v1010, 7
      %v1012 = vadd.s32 %v1011, 8
      %v1013 = vlaneseq
      %v1014 = vshrl.u32 %v1013, 7
      %v1015 = vsub.s32 0, %v1014
      %v1016 = vrot.slane %v1008, %v1015
      %v1017 = vlaneseq
      %v1018 = vshrl.u32 %v1017, 7
      %v1019 = vsub.s32 7, %v1018
      %v1020 = vrot.slane %v1009, %v1019
      %v1021 = vrot.slane %v1008, 7
      %v1022 = vrot.slane %v1009, 7
      %vm1023 = vcmp.lt.s32.totalorder %v1011, 1
      %v1024 = vsel %vm1023, %v1021, %v1022
      %v1025 = vsel %vm1023, %v1022, %v1021
      %vm1026 = vcmp.lt.s32.totalorder %v1012, 1
      %v1027 = vsel %vm1023, %v1016, %v1025
      %v1028 = vsel %vm1026, %v1016, %v1024
      %v1029 = vrot.slane %v1008, 1
      %v1030 = vrot.slane %v1009, 1
      %vm1031 = vcmp.lt.s32.totalorder %v1011, 7
      %v1032 = vsel %vm1031, %v1029, %v1030
      %v1033 = vsel %vm1031, %v1030, %v1029
      %vm1034 = vcmp.ge.s32.totalorder %v1011, 15
      %vm1035 = vcmp.ge.s32.totalorder %v1012, 15
      %v1036 = vsel %vm1034, %v1020, %v1032
      %v1037 = vsel %vm1035, %v1020, %v1033
      %v1038 = vadd.f32 %v1008, %v1027
      %v1039 = vadd.f32 %v1009, %v1028
      %v1040 = vadd.f32 %v1038, %v1036
      %v1041 = vadd.f32 %v1039, %v1037
      %v1042 = vrot.slane %v1008, 6
      %v1043 = vrot.slane %v1009, 6
      %vm1044 = vcmp.lt.s32.totalorder %v1011, 2
      %v1045 = vsel %vm1044, %v1042, %v1043
      %v1046 = vsel %vm1044, %v1043, %v1042
      %vm1047 = vcmp.lt.s32.totalorder %v1012, 2
      %v1048 = vsel %vm1044, %v1016, %v1046
      %v1049 = vsel %vm1047, %v1016, %v1045
      %v1050 = vrot.slane %v1008, 2
      %v1051 = vrot.slane %v1009, 2
      %vm1052 = vcmp.lt.s32.totalorder %v1011, 6
      %v1053 = vsel %vm1052, %v1050, %v1051
      %v1054 = vsel %vm1052, %v1051, %v1050
      %vm1055 = vcmp.ge.s32.totalorder %v1011, 14
      %vm1056 = vcmp.ge.s32.totalorder %v1012, 14
      %v1057 = vsel %vm1055, %v1020, %v1053
      %v1058 = vsel %vm1056, %v1020, %v1054
      %v1059 = vadd.f32 %v1040, %v1048
      %v1060 = vadd.f32 %v1041, %v1049
      %v1061 = vadd.f32 %v1059, %v1057
      %v1062 = vadd.f32 %v1060, %v1058
      %v1063 = vmul.f32 %v1061, 0.2
      %v1064 = vmul.f32 %v1062, 0.2
      %v1065 = vsub.f32 %v1008, %v1063
      %v1066 = vsub.f32 %v1009, %v1064
      %v1067 = vld [vmem:[%s5] sm:$0xff]
      %v1068 = vld [vmem:[%s5 + $0x8] sm:$0xff]
      %v1069 = vld [vmem:[%s5 + $0x10] sm:$0xff]
      %v1070 = vld [vmem:[%s5 + $0x18] sm:$0xff]
      %v1071 = vpack.c.bf16 %v1066, %v1065
      %v1072 = vpack.c.bf16 %v1068, %v1067
      %v1073 = vpack.c.bf16 %v1070, %v1069
      %v1075 = vsel %vm388, %v1071, 0
      %1077 = vmatprep.subr.bf16.mxu0 0
      %1078 = vmatpush1.bf16.msra.mxu0 %v1072
      %1079 = vmatprep.subr.bf16.mxu0 0
      %1080 = vmatpush1.bf16.msra.mxu0 %v1073
      %1081 = vmatprep.subr.bf16.mxu0 0
      %1082 = vmatpush1.bf16.msra.mxu0 0
      %1083 = vmatprep.subr.bf16.mxu0 0
      %1084 = vmatpush1.bf16.msra.mxu0 0
      %1085 = vmatprep.subr.bf16.mxu0 0
      %1086 = vmatpush1.bf16.msra.mxu0 0
      %1087 = vmatprep.subr.bf16.mxu0 0
      %1088 = vmatpush1.bf16.msra.mxu0 0
      %1089 = vmatprep.subr.bf16.mxu0 0
      %1090 = vmatpush1.bf16.msra.mxu0 0
      %1091 = vmatprep.subr.bf16.mxu0 0
      %1092 = vmatpush1.bf16.msra.mxu0 0
      %1093 = vmatprep.subr.bf16.mxu0 0
      %1094 = vmatpush1.bf16.msra.mxu0 0
      %1095 = vmatprep.subr.bf16.mxu0 0
      %1096 = vmatpush1.bf16.msra.mxu0 0
      %1097 = vmatprep.subr.bf16.mxu0 0
      %1098 = vmatpush1.bf16.msra.mxu0 0
      %1099 = vmatprep.subr.bf16.mxu0 0
      %1100 = vmatpush1.bf16.msra.mxu0 0
      %1101 = vmatprep.subr.bf16.mxu0 0
      %1102 = vmatpush1.bf16.msra.mxu0 0
      %1103 = vmatprep.subr.bf16.mxu0 0
      %1104 = vmatpush1.bf16.msra.mxu0 0
      %1105 = vmatprep.subr.bf16.mxu0 0
      %1106 = vmatpush1.bf16.msra.mxu0 0
      %1107 = vmatprep.subr.bf16.mxu0 0
      %1108 = vmatpush1.bf16.msra.mxu0 0
      %1109 = vmatprep.mubr.bf16.mxu0 0
      %1110 = vmatmul.mubr.bf16.gmra.mrb[0].mxu0 %v1075
      %v1111 = vpop.f32.mrb[0].mxu0
      %v1112 = vadd.f32 0.0, %v1111
      %v1113 = vpop.f32.mrb[0].mxu0
      %v1114 = vpop.f32.mrb[0].mxu0
      %v1115 = vadd.f32 0.0, %v1114
      %v1116 = vpop.f32.mrb[0].mxu0
      %1117 = vdwg.mxu0
      %v1118 = vmax.f32 %v1112, 0.0
      %v1119 = vmax.f32 %v1115, 0.0
      %v1120 = vld [vmem:[%s6] sm:$0xff]
      %v1121 = vld [vmem:[%s6 + $0x8] sm:$0xff]
      %v1122 = vld [vmem:[%s6 + $0x10] sm:$0xff]
      %v1123 = vld [vmem:[%s6 + $0x18] sm:$0xff]
      %v1124 = vld [vmem:[%s6 + $0x20] sm:$0xff]
      %v1125 = vld [vmem:[%s6 + $0x28] sm:$0xff]
      %v1126 = vld [vmem:[%s6 + $0x30] sm:$0xff]
      %v1127 = vld [vmem:[%s6 + $0x38] sm:$0xff]
      %v1128 = vpack.c.bf16 %v1119, %v1118
      %v1129 = vpack.c.bf16 %v1121, %v1120
      %v1130 = vpack.c.bf16 %v1123, %v1122
      %v1131 = vpack.c.bf16 %v1125, %v1124
      %v1132 = vpack.c.bf16 %v1127, %v1126
      %vm1133 = vcmask 523264
      %v1135 = vsel %vm1133, %v1128, 0
      %1137 = vmatprep.subr.bf16.mxu0 0
      %1138 = vmatpush1.bf16.msra.mxu0 %v1129
      %1139 = vmatprep.subr.bf16.mxu0 0
      %1140 = vmatpush1.bf16.msra.mxu0 %v1130
      %1141 = vmatprep.subr.bf16.mxu0 0
      %1142 = vmatpush1.bf16.msra.mxu0 %v1131
      %1143 = vmatprep.subr.bf16.mxu0 0
      %1144 = vmatpush1.bf16.msra.mxu0 %v1132
      %1145 = vmatprep.subr.bf16.mxu0 0
      %1146 = vmatpush1.bf16.msra.mxu0 0
      %1147 = vmatprep.subr.bf16.mxu0 0
      %1148 = vmatpush1.bf16.msra.mxu0 0
      %1149 = vmatprep.subr.bf16.mxu0 0
      %1150 = vmatpush1.bf16.msra.mxu0 0
      %1151 = vmatprep.subr.bf16.mxu0 0
      %1152 = vmatpush1.bf16.msra.mxu0 0
      %1153 = vmatprep.subr.bf16.mxu0 0
      %1154 = vmatpush1.bf16.msra.mxu0 0
      %1155 = vmatprep.subr.bf16.mxu0 0
      %1156 = vmatpush1.bf16.msra.mxu0 0
      %1157 = vmatprep.subr.bf16.mxu0 0
      %1158 = vmatpush1.bf16.msra.mxu0 0
      %1159 = vmatprep.subr.bf16.mxu0 0
      %1160 = vmatpush1.bf16.msra.mxu0 0
      %1161 = vmatprep.subr.bf16.mxu0 0
      %1162 = vmatpush1.bf16.msra.mxu0 0
      %1163 = vmatprep.subr.bf16.mxu0 0
      %1164 = vmatpush1.bf16.msra.mxu0 0
      %1165 = vmatprep.subr.bf16.mxu0 0
      %1166 = vmatpush1.bf16.msra.mxu0 0
      %1167 = vmatprep.subr.bf16.mxu0 0
      %1168 = vmatpush1.bf16.msra.mxu0 0
      %1169 = vmatprep.mubr.bf16.mxu0 0
      %1170 = vmatmul.mubr.bf16.gmra.mrb[0].mxu0 %v1135
      %v1171 = vpop.f32.mrb[0].mxu0
      %v1172 = vadd.f32 0.0, %v1171
      %v1173 = vpop.f32.mrb[0].mxu0
      %v1174 = vpop.f32.mrb[0].mxu0
      %v1175 = vadd.f32 0.0, %v1174
      %v1176 = vpop.f32.mrb[0].mxu0
      %1177 = vdwg.mxu0
      %v1178 = vadd.f32 %v1065, %v1172
      %v1179 = vadd.f32 %v1066, %v1175
      %v1180 = vlaneseq
      %v1181 = vshrl.u32 %v1180, 7
      %v1182 = vsub.s32 0, %v1181
      %v1183 = vrot.slane %v1178, %v1182
      %v1184 = vlaneseq
      %v1185 = vshrl.u32 %v1184, 7
      %v1186 = vsub.s32 7, %v1185
      %v1187 = vrot.slane %v1179, %v1186
      %v1188 = vrot.slane %v1178, 7
      %v1189 = vrot.slane %v1179, 7
      %v1190 = vsel %vm1023, %v1188, %v1189
      %v1191 = vsel %vm1023, %v1189, %v1188
      %v1192 = vsel %vm1023, %v1183, %v1191
      %v1193 = vsel %vm1026, %v1183, %v1190
      %v1194 = vrot.slane %v1178, 1
      %v1195 = vrot.slane %v1179, 1
      %v1196 = vsel %vm1031, %v1194, %v1195
      %v1197 = vsel %vm1031, %v1195, %v1194
      %v1198 = vsel %vm1034, %v1187, %v1196
      %v1199 = vsel %vm1035, %v1187, %v1197
      %v1200 = vadd.f32 %v1178, %v1192
      %v1201 = vadd.f32 %v1179, %v1193
      %v1202 = vadd.f32 %v1200, %v1198
      %v1203 = vadd.f32 %v1201, %v1199
      %v1204 = vrot.slane %v1178, 6
      %v1205 = vrot.slane %v1179, 6
      %v1206 = vsel %vm1044, %v1204, %v1205
      %v1207 = vsel %vm1044, %v1205, %v1204
      %v1208 = vsel %vm1044, %v1183, %v1207
      %v1209 = vsel %vm1047, %v1183, %v1206
      %v1210 = vrot.slane %v1178, 2
      %v1211 = vrot.slane %v1179, 2
      %v1212 = vsel %vm1052, %v1210, %v1211
      %v1213 = vsel %vm1052, %v1211, %v1210
      %v1214 = vsel %vm1055, %v1187, %v1212
      %v1215 = vsel %vm1056, %v1187, %v1213
      %v1216 = vadd.f32 %v1202, %v1208
      %v1217 = vadd.f32 %v1203, %v1209
      %v1218 = vadd.f32 %v1216, %v1214
      %v1219 = vadd.f32 %v1217, %v1215
      %v1220 = vmul.f32 %v1218, 0.2
      %v1221 = vmul.f32 %v1219, 0.2
      %v1222 = vsub.f32 %v1178, %v1220
      %v1223 = vsub.f32 %v1179, %v1221
      %s1224 = scalar_lea.vmem %s1, 32
      %v1225 = vld [vmem:[%s1224] sm:$0xff]
      %v1226 = vld [vmem:[%s1224 + $0x8] sm:$0xff]
      %v1227 = vld [vmem:[%s1224 + $0x10] sm:$0xff]
      %v1228 = vld [vmem:[%s1224 + $0x18] sm:$0xff]
      %v1229 = vpack.c.bf16 %v1223, %v1222
      %v1230 = vpack.c.bf16 %v1226, %v1225
      %v1231 = vpack.c.bf16 %v1228, %v1227
      %s1232 = scalar_lea.vmem %s2, 1
      %v1233 = vld [vmem:[%s1232] sm:$0x1]
      %v1235 = vlaneseq
      %v1236 = vshrl.u32 %v1235, 7
      %v1237 = vsub.s32 0, %v1236
      %v1238 = vrot.slane %v1233, %v1237
      %v1241 = vsel %vm388, %v1229, 0
      %1243 = vmatprep.subr.bf16.mxu0 0
      %1244 = vmatpush1.bf16.msra.mxu0 %v1230
      %1245 = vmatprep.subr.bf16.mxu0 0
      %1246 = vmatpush1.bf16.msra.mxu0 %v1231
      %1247 = vmatprep.subr.bf16.mxu0 0
      %1248 = vmatpush1.bf16.msra.mxu0 0
      %1249 = vmatprep.subr.bf16.mxu0 0
      %1250 = vmatpush1.bf16.msra.mxu0 0
      %1251 = vmatprep.subr.bf16.mxu0 0
      %1252 = vmatpush1.bf16.msra.mxu0 0
      %1253 = vmatprep.subr.bf16.mxu0 0
      %1254 = vmatpush1.bf16.msra.mxu0 0
      %1255 = vmatprep.subr.bf16.mxu0 0
      %1256 = vmatpush1.bf16.msra.mxu0 0
      %1257 = vmatprep.subr.bf16.mxu0 0
      %1258 = vmatpush1.bf16.msra.mxu0 0
      %1259 = vmatprep.subr.bf16.mxu0 0
      %1260 = vmatpush1.bf16.msra.mxu0 0
      %1261 = vmatprep.subr.bf16.mxu0 0
      %1262 = vmatpush1.bf16.msra.mxu0 0
      %1263 = vmatprep.subr.bf16.mxu0 0
      %1264 = vmatpush1.bf16.msra.mxu0 0
      %1265 = vmatprep.subr.bf16.mxu0 0
      %1266 = vmatpush1.bf16.msra.mxu0 0
      %1267 = vmatprep.subr.bf16.mxu0 0
      %1268 = vmatpush1.bf16.msra.mxu0 0
      %1269 = vmatprep.subr.bf16.mxu0 0
      %1270 = vmatpush1.bf16.msra.mxu0 0
      %1271 = vmatprep.subr.bf16.mxu0 0
      %1272 = vmatpush1.bf16.msra.mxu0 0
      %1273 = vmatprep.subr.bf16.mxu0 0
      %1274 = vmatpush1.bf16.msra.mxu0 0
      %1275 = vmatprep.mubr.bf16.mxu0 0
      %1276 = vmatmul.mubr.bf16.gmra.mrb[0].mxu0 %v1241
      %v1277 = vpop.f32.mrb[0].mxu0
      %v1278 = vadd.f32 %v1238, %v1277
      %v1279 = vpop.f32.mrb[0].mxu0
      %v1280 = vpop.f32.mrb[0].mxu0
      %v1281 = vadd.f32 %v1238, %v1280
      %v1282 = vpop.f32.mrb[0].mxu0
      %1283 = vdwg.mxu0
      %v1284 = vpack.c.bf16 %v1281, %v1278
      %1286 = vrot.lane.b32.xlu0 %v1284, 96
      %v1287 = vpop.permute.xlu0 %1286
      %v1289 = vsel %vm437, %v1284, 0
      %v1292 = vsel %vm437, %v1287, 0
      %1294 = vmatprep.subr.bf16.mxu0 0
      %1295 = vmatpush1.bf16.xpose.msra.mxu0 %v1292
      %1296 = vmatprep.subr.bf16.mxu0 0
      %1297 = vmatpush1.bf16.xpose.msra.mxu0 0
      %1298 = vmatprep.subr.bf16.mxu0 0
      %1299 = vmatpush1.bf16.xpose.msra.mxu0 0
      %1300 = vmatprep.subr.bf16.mxu0 0
      %1301 = vmatpush1.bf16.xpose.msra.mxu0 0
      %1302 = vmatprep.subr.bf16.mxu0 0
      %1303 = vmatpush1.bf16.xpose.msra.mxu0 0
      %1304 = vmatprep.subr.bf16.mxu0 0
      %1305 = vmatpush1.bf16.xpose.msra.mxu0 0
      %1306 = vmatprep.subr.bf16.mxu0 0
      %1307 = vmatpush1.bf16.xpose.msra.mxu0 0
      %1308 = vmatprep.subr.bf16.mxu0 0
      %1309 = vmatpush1.bf16.xpose.msra.mxu0 0
      %1310 = vmatprep.subr.bf16.mxu0 0
      %1311 = vmatpush1.bf16.xpose.msra.mxu0 0
      %1312 = vmatprep.subr.bf16.mxu0 0
      %1313 = vmatpush1.bf16.xpose.msra.mxu0 0
      %1314 = vmatprep.subr.bf16.mxu0 0
      %1315 = vmatpush1.bf16.xpose.msra.mxu0 0
      %1316 = vmatprep.subr.bf16.mxu0 0
      %1317 = vmatpush1.bf16.xpose.msra.mxu0 0
      %1318 = vmatprep.subr.bf16.mxu0 0
      %1319 = vmatpush1.bf16.xpose.msra.mxu0 0
      %1320 = vmatprep.subr.bf16.mxu0 0
      %1321 = vmatpush1.bf16.xpose.msra.mxu0 0
      %1322 = vmatprep.subr.bf16.mxu0 0
      %1323 = vmatpush1.bf16.xpose.msra.mxu0 0
      %1324 = vmatprep.subr.bf16.mxu0 0
      %1325 = vmatpush1.bf16.xpose.msra.mxu0 0
      %1326 = vmatprep.mubr.bf16.mxu0 0
      %1327 = vmatmul.mubr.bf16.gmra.mrb[0].mxu0 %v1289
      %v1328 = vpop.f32.mrb[0].mxu0
      %v1329 = vadd.f32 0.0, %v1328
      %v1330 = vpop.f32.mrb[0].mxu0
      %v1331 = vpop.f32.mrb[0].mxu0
      %v1332 = vadd.f32 0.0, %v1331
      %v1333 = vpop.f32.mrb[0].mxu0
      %1334 = vdwg.mxu0
      %v1335 = vsel %vm485, %v1329, -inf
      %1336 = vmax.xlane.f32.xlu0 %v1335
      %v1337 = vpop.xlane.xlu0 %1336
      %v1338 = vsel %vm485, %v1332, -inf
      %1339 = vmax.xlane.f32.xlu0 %v1338
      %v1340 = vpop.xlane.xlu0 %1339
      %v1341 = vsub.f32 %v1329, %v1337
      %v1342 = vsub.f32 %v1332, %v1340
      %v1343 = vmul.f32 %v1341, 1.442695
      %v1344 = vpow.pop %v1343
      %v1345 = vmul.f32 %v1342, 1.442695
      %v1346 = vpow.pop %v1345
      %v1347 = vsel %vm485, %v1344, 0.0
      %1348 = vadd.xlane.f32.xlu0 %v1347
      %v1349 = vpop.xlane.xlu0 %1348
      %v1350 = vsel %vm485, %v1346, 0.0
      %1351 = vadd.xlane.f32.xlu0 %v1350
      %v1352 = vpop.xlane.xlu0 %1351
      %v1353 = vrcp.pop %v1349
      %v1354 = vrcp.pop %v1352
      %v1355 = vmul.f32 %v1344, %v1353
      %v1356 = vmul.f32 %v1346, %v1354
      %v1357 = vpack.c.bf16 %v1356, %v1355
      %1358 = vrot.lane.b32.xlu0 %v1284, 64
      %v1359 = vpop.permute.xlu0 %1358
      %v1362 = vsel %vm485, %v1357, 0
      %1364 = vmatprep.subr.bf16.mxu0 0
      %1365 = vmatpush1.bf16.msra.mxu0 %v1359
      %1366 = vmatprep.subr.bf16.mxu0 0
      %1367 = vmatpush1.bf16.msra.mxu0 0
      %1368 = vmatprep.subr.bf16.mxu0 0
      %1369 = vmatpush1.bf16.msra.mxu0 0
      %1370 = vmatprep.subr.bf16.mxu0 0
      %1371 = vmatpush1.bf16.msra.mxu0 0
      %1372 = vmatprep.subr.bf16.mxu0 0
      %1373 = vmatpush1.bf16.msra.mxu0 0
      %1374 = vmatprep.subr.bf16.mxu0 0
      %1375 = vmatpush1.bf16.msra.mxu0 0
      %1376 = vmatprep.subr.bf16.mxu0 0
      %1377 = vmatpush1.bf16.msra.mxu0 0
      %1378 = vmatprep.subr.bf16.mxu0 0
      %1379 = vmatpush1.bf16.msra.mxu0 0
      %1380 = vmatprep.subr.bf16.mxu0 0
      %1381 = vmatpush1.bf16.msra.mxu0 0
      %1382 = vmatprep.subr.bf16.mxu0 0
      %1383 = vmatpush1.bf16.msra.mxu0 0
      %1384 = vmatprep.subr.bf16.mxu0 0
      %1385 = vmatpush1.bf16.msra.mxu0 0
      %1386 = vmatprep.subr.bf16.mxu0 0
      %1387 = vmatpush1.bf16.msra.mxu0 0
      %1388 = vmatprep.subr.bf16.mxu0 0
      %1389 = vmatpush1.bf16.msra.mxu0 0
      %1390 = vmatprep.subr.bf16.mxu0 0
      %1391 = vmatpush1.bf16.msra.mxu0 0
      %1392 = vmatprep.subr.bf16.mxu0 0
      %1393 = vmatpush1.bf16.msra.mxu0 0
      %1394 = vmatprep.subr.bf16.mxu0 0
      %1395 = vmatpush1.bf16.msra.mxu0 0
      %1396 = vmatprep.mubr.bf16.mxu0 0
      %1397 = vmatmul.mubr.bf16.gmra.mrb[0].mxu0 %v1362
      %v1398 = vpop.f32.mrb[0].mxu0
      %v1399 = vadd.f32 0.0, %v1398
      %v1400 = vpop.f32.mrb[0].mxu0
      %v1401 = vpop.f32.mrb[0].mxu0
      %v1402 = vadd.f32 0.0, %v1401
      %v1403 = vpop.f32.mrb[0].mxu0
      %1404 = vdwg.mxu0
      %1405 = vrot.lane.b32.xlu0 %v1284, 120
      %v1406 = vpop.permute.xlu0 %1405
      %1407 = vrot.lane.b32.xlu0 %v1284, 88
      %v1408 = vpop.permute.xlu0 %1407
      %v1410 = vsel %vm437, %v1406, 0
      %v1413 = vsel %vm437, %v1408, 0
      %1415 = vmatprep.subr.bf16.mxu0 0
      %1416 = vmatpush1.bf16.xpose.msra.mxu0 %v1413
      %1417 = vmatprep.subr.bf16.mxu0 0
      %1418 = vmatpush1.bf16.xpose.msra.mxu0 0
      %1419 = vmatprep.subr.bf16.mxu0 0
      %1420 = vmatpush1.bf16.xpose.msra.mxu0 0
      %1421 = vmatprep.subr.bf16.mxu0 0
      %1422 = vmatpush1.bf16.xpose.msra.mxu0 0
      %1423 = vmatprep.subr.bf16.mxu0 0
      %1424 = vmatpush1.bf16.xpose.msra.mxu0 0
      %1425 = vmatprep.subr.bf16.mxu0 0
      %1426 = vmatpush1.bf16.xpose.msra.mxu0 0
      %1427 = vmatprep.subr.bf16.mxu0 0
      %1428 = vmatpush1.bf16.xpose.msra.mxu0 0
      %1429 = vmatprep.subr.bf16.mxu0 0
      %1430 = vmatpush1.bf16.xpose.msra.mxu0 0
      %1431 = vmatprep.subr.bf16.mxu0 0
      %1432 = vmatpush1.bf16.xpose.msra.mxu0 0
      %1433 = vmatprep.subr.bf16.mxu0 0
      %1434 = vmatpush1.bf16.xpose.msra.mxu0 0
      %1435 = vmatprep.subr.bf16.mxu0 0
      %1436 = vmatpush1.bf16.xpose.msra.mxu0 0
      %1437 = vmatprep.subr.bf16.mxu0 0
      %1438 = vmatpush1.bf16.xpose.msra.mxu0 0
      %1439 = vmatprep.subr.bf16.mxu0 0
      %1440 = vmatpush1.bf16.xpose.msra.mxu0 0
      %1441 = vmatprep.subr.bf16.mxu0 0
      %1442 = vmatpush1.bf16.xpose.msra.mxu0 0
      %1443 = vmatprep.subr.bf16.mxu0 0
      %1444 = vmatpush1.bf16.xpose.msra.mxu0 0
      %1445 = vmatprep.subr.bf16.mxu0 0
      %1446 = vmatpush1.bf16.xpose.msra.mxu0 0
      %1447 = vmatprep.mubr.bf16.mxu0 0
      %1448 = vmatmul.mubr.bf16.gmra.mrb[0].mxu0 %v1410
      %v1449 = vpop.f32.mrb[0].mxu0
      %v1450 = vadd.f32 0.0, %v1449
      %v1451 = vpop.f32.mrb[0].mxu0
      %v1452 = vpop.f32.mrb[0].mxu0
      %v1453 = vadd.f32 0.0, %v1452
      %v1454 = vpop.f32.mrb[0].mxu0
      %1455 = vdwg.mxu0
      %v1456 = vsel %vm485, %v1450, -inf
      %1457 = vmax.xlane.f32.xlu0 %v1456
      %v1458 = vpop.xlane.xlu0 %1457
      %v1459 = vsel %vm485, %v1453, -inf
      %1460 = vmax.xlane.f32.xlu0 %v1459
      %v1461 = vpop.xlane.xlu0 %1460
      %v1462 = vsub.f32 %v1450, %v1458
      %v1463 = vsub.f32 %v1453, %v1461
      %v1464 = vmul.f32 %v1462, 1.442695
      %v1465 = vpow.pop %v1464
      %v1466 = vmul.f32 %v1463, 1.442695
      %v1467 = vpow.pop %v1466
      %v1468 = vsel %vm485, %v1465, 0.0
      %1469 = vadd.xlane.f32.xlu0 %v1468
      %v1470 = vpop.xlane.xlu0 %1469
      %v1471 = vsel %vm485, %v1467, 0.0
      %1472 = vadd.xlane.f32.xlu0 %v1471
      %v1473 = vpop.xlane.xlu0 %1472
      %v1474 = vrcp.pop %v1470
      %v1475 = vrcp.pop %v1473
      %v1476 = vmul.f32 %v1465, %v1474
      %v1477 = vmul.f32 %v1467, %v1475
      %v1478 = vpack.c.bf16 %v1477, %v1476
      %1479 = vrot.lane.b32.xlu0 %v1284, 56
      %v1480 = vpop.permute.xlu0 %1479
      %v1483 = vsel %vm485, %v1478, 0
      %1485 = vmatprep.subr.bf16.mxu0 0
      %1486 = vmatpush1.bf16.msra.mxu0 %v1480
      %1487 = vmatprep.subr.bf16.mxu0 0
      %1488 = vmatpush1.bf16.msra.mxu0 0
      %1489 = vmatprep.subr.bf16.mxu0 0
      %1490 = vmatpush1.bf16.msra.mxu0 0
      %1491 = vmatprep.subr.bf16.mxu0 0
      %1492 = vmatpush1.bf16.msra.mxu0 0
      %1493 = vmatprep.subr.bf16.mxu0 0
      %1494 = vmatpush1.bf16.msra.mxu0 0
      %1495 = vmatprep.subr.bf16.mxu0 0
      %1496 = vmatpush1.bf16.msra.mxu0 0
      %1497 = vmatprep.subr.bf16.mxu0 0
      %1498 = vmatpush1.bf16.msra.mxu0 0
      %1499 = vmatprep.subr.bf16.mxu0 0
      %1500 = vmatpush1.bf16.msra.mxu0 0
      %1501 = vmatprep.subr.bf16.mxu0 0
      %1502 = vmatpush1.bf16.msra.mxu0 0
      %1503 = vmatprep.subr.bf16.mxu0 0
      %1504 = vmatpush1.bf16.msra.mxu0 0
      %1505 = vmatprep.subr.bf16.mxu0 0
      %1506 = vmatpush1.bf16.msra.mxu0 0
      %1507 = vmatprep.subr.bf16.mxu0 0
      %1508 = vmatpush1.bf16.msra.mxu0 0
      %1509 = vmatprep.subr.bf16.mxu0 0
      %1510 = vmatpush1.bf16.msra.mxu0 0
      %1511 = vmatprep.subr.bf16.mxu0 0
      %1512 = vmatpush1.bf16.msra.mxu0 0
      %1513 = vmatprep.subr.bf16.mxu0 0
      %1514 = vmatpush1.bf16.msra.mxu0 0
      %1515 = vmatprep.subr.bf16.mxu0 0
      %1516 = vmatpush1.bf16.msra.mxu0 0
      %1517 = vmatprep.mubr.bf16.mxu0 0
      %1518 = vmatmul.mubr.bf16.gmra.mrb[0].mxu0 %v1483
      %v1519 = vpop.f32.mrb[0].mxu0
      %v1520 = vadd.f32 0.0, %v1519
      %v1521 = vpop.f32.mrb[0].mxu0
      %v1522 = vpop.f32.mrb[0].mxu0
      %v1523 = vadd.f32 0.0, %v1522
      %v1524 = vpop.f32.mrb[0].mxu0
      %1525 = vdwg.mxu0
      %1526 = vrot.lane.b32.xlu0 %v1284, 112
      %v1527 = vpop.permute.xlu0 %1526
      %1528 = vrot.lane.b32.xlu0 %v1284, 80
      %v1529 = vpop.permute.xlu0 %1528
      %v1531 = vsel %vm437, %v1527, 0
      %v1534 = vsel %vm437, %v1529, 0
      %1536 = vmatprep.subr.bf16.mxu0 0
      %1537 = vmatpush1.bf16.xpose.msra.mxu0 %v1534
      %1538 = vmatprep.subr.bf16.mxu0 0
      %1539 = vmatpush1.bf16.xpose.msra.mxu0 0
      %1540 = vmatprep.subr.bf16.mxu0 0
      %1541 = vmatpush1.bf16.xpose.msra.mxu0 0
      %1542 = vmatprep.subr.bf16.mxu0 0
      %1543 = vmatpush1.bf16.xpose.msra.mxu0 0
      %1544 = vmatprep.subr.bf16.mxu0 0
      %1545 = vmatpush1.bf16.xpose.msra.mxu0 0
      %1546 = vmatprep.subr.bf16.mxu0 0
      %1547 = vmatpush1.bf16.xpose.msra.mxu0 0
      %1548 = vmatprep.subr.bf16.mxu0 0
      %1549 = vmatpush1.bf16.xpose.msra.mxu0 0
      %1550 = vmatprep.subr.bf16.mxu0 0
      %1551 = vmatpush1.bf16.xpose.msra.mxu0 0
      %1552 = vmatprep.subr.bf16.mxu0 0
      %1553 = vmatpush1.bf16.xpose.msra.mxu0 0
      %1554 = vmatprep.subr.bf16.mxu0 0
      %1555 = vmatpush1.bf16.xpose.msra.mxu0 0
      %1556 = vmatprep.subr.bf16.mxu0 0
      %1557 = vmatpush1.bf16.xpose.msra.mxu0 0
      %1558 = vmatprep.subr.bf16.mxu0 0
      %1559 = vmatpush1.bf16.xpose.msra.mxu0 0
      %1560 = vmatprep.subr.bf16.mxu0 0
      %1561 = vmatpush1.bf16.xpose.msra.mxu0 0
      %1562 = vmatprep.subr.bf16.mxu0 0
      %1563 = vmatpush1.bf16.xpose.msra.mxu0 0
      %1564 = vmatprep.subr.bf16.mxu0 0
      %1565 = vmatpush1.bf16.xpose.msra.mxu0 0
      %1566 = vmatprep.subr.bf16.mxu0 0
      %1567 = vmatpush1.bf16.xpose.msra.mxu0 0
      %1568 = vmatprep.mubr.bf16.mxu0 0
      %1569 = vmatmul.mubr.bf16.gmra.mrb[0].mxu0 %v1531
      %v1570 = vpop.f32.mrb[0].mxu0
      %v1571 = vadd.f32 0.0, %v1570
      %v1572 = vpop.f32.mrb[0].mxu0
      %v1573 = vpop.f32.mrb[0].mxu0
      %v1574 = vadd.f32 0.0, %v1573
      %v1575 = vpop.f32.mrb[0].mxu0
      %1576 = vdwg.mxu0
      %v1577 = vsel %vm485, %v1571, -inf
      %1578 = vmax.xlane.f32.xlu0 %v1577
      %v1579 = vpop.xlane.xlu0 %1578
      %v1580 = vsel %vm485, %v1574, -inf
      %1581 = vmax.xlane.f32.xlu0 %v1580
      %v1582 = vpop.xlane.xlu0 %1581
      %v1583 = vsub.f32 %v1571, %v1579
      %v1584 = vsub.f32 %v1574, %v1582
      %v1585 = vmul.f32 %v1583, 1.442695
      %v1586 = vpow.pop %v1585
      %v1587 = vmul.f32 %v1584, 1.442695
      %v1588 = vpow.pop %v1587
      %v1589 = vsel %vm485, %v1586, 0.0
      %1590 = vadd.xlane.f32.xlu0 %v1589
      %v1591 = vpop.xlane.xlu0 %1590
      %v1592 = vsel %vm485, %v1588, 0.0
      %1593 = vadd.xlane.f32.xlu0 %v1592
      %v1594 = vpop.xlane.xlu0 %1593
      %v1595 = vrcp.pop %v1591
      %v1596 = vrcp.pop %v1594
      %v1597 = vmul.f32 %v1586, %v1595
      %v1598 = vmul.f32 %v1588, %v1596
      %v1599 = vpack.c.bf16 %v1598, %v1597
      %1600 = vrot.lane.b32.xlu0 %v1284, 48
      %v1601 = vpop.permute.xlu0 %1600
      %v1604 = vsel %vm485, %v1599, 0
      %1606 = vmatprep.subr.bf16.mxu0 0
      %1607 = vmatpush1.bf16.msra.mxu0 %v1601
      %1608 = vmatprep.subr.bf16.mxu0 0
      %1609 = vmatpush1.bf16.msra.mxu0 0
      %1610 = vmatprep.subr.bf16.mxu0 0
      %1611 = vmatpush1.bf16.msra.mxu0 0
      %1612 = vmatprep.subr.bf16.mxu0 0
      %1613 = vmatpush1.bf16.msra.mxu0 0
      %1614 = vmatprep.subr.bf16.mxu0 0
      %1615 = vmatpush1.bf16.msra.mxu0 0
      %1616 = vmatprep.subr.bf16.mxu0 0
      %1617 = vmatpush1.bf16.msra.mxu0 0
      %1618 = vmatprep.subr.bf16.mxu0 0
      %1619 = vmatpush1.bf16.msra.mxu0 0
      %1620 = vmatprep.subr.bf16.mxu0 0
      %1621 = vmatpush1.bf16.msra.mxu0 0
      %1622 = vmatprep.subr.bf16.mxu0 0
      %1623 = vmatpush1.bf16.msra.mxu0 0
      %1624 = vmatprep.subr.bf16.mxu0 0
      %1625 = vmatpush1.bf16.msra.mxu0 0
      %1626 = vmatprep.subr.bf16.mxu0 0
      %1627 = vmatpush1.bf16.msra.mxu0 0
      %1628 = vmatprep.subr.bf16.mxu0 0
      %1629 = vmatpush1.bf16.msra.mxu0 0
      %1630 = vmatprep.subr.bf16.mxu0 0
      %1631 = vmatpush1.bf16.msra.mxu0 0
      %1632 = vmatprep.subr.bf16.mxu0 0
      %1633 = vmatpush1.bf16.msra.mxu0 0
      %1634 = vmatprep.subr.bf16.mxu0 0
      %1635 = vmatpush1.bf16.msra.mxu0 0
      %1636 = vmatprep.subr.bf16.mxu0 0
      %1637 = vmatpush1.bf16.msra.mxu0 0
      %1638 = vmatprep.mubr.bf16.mxu0 0
      %1639 = vmatmul.mubr.bf16.gmra.mrb[0].mxu0 %v1604
      %v1640 = vpop.f32.mrb[0].mxu0
      %v1641 = vadd.f32 0.0, %v1640
      %v1642 = vpop.f32.mrb[0].mxu0
      %v1643 = vpop.f32.mrb[0].mxu0
      %v1644 = vadd.f32 0.0, %v1643
      %v1645 = vpop.f32.mrb[0].mxu0
      %1646 = vdwg.mxu0
      %1647 = vrot.lane.b32.xlu0 %v1284, 104
      %v1648 = vpop.permute.xlu0 %1647
      %1649 = vrot.lane.b32.xlu0 %v1284, 72
      %v1650 = vpop.permute.xlu0 %1649
      %v1652 = vsel %vm437, %v1648, 0
      %v1655 = vsel %vm437, %v1650, 0
      %1657 = vmatprep.subr.bf16.mxu0 0
      %1658 = vmatpush1.bf16.xpose.msra.mxu0 %v1655
      %1659 = vmatprep.subr.bf16.mxu0 0
      %1660 = vmatpush1.bf16.xpose.msra.mxu0 0
      %1661 = vmatprep.subr.bf16.mxu0 0
      %1662 = vmatpush1.bf16.xpose.msra.mxu0 0
      %1663 = vmatprep.subr.bf16.mxu0 0
      %1664 = vmatpush1.bf16.xpose.msra.mxu0 0
      %1665 = vmatprep.subr.bf16.mxu0 0
      %1666 = vmatpush1.bf16.xpose.msra.mxu0 0
      %1667 = vmatprep.subr.bf16.mxu0 0
      %1668 = vmatpush1.bf16.xpose.msra.mxu0 0
      %1669 = vmatprep.subr.bf16.mxu0 0
      %1670 = vmatpush1.bf16.xpose.msra.mxu0 0
      %1671 = vmatprep.subr.bf16.mxu0 0
      %1672 = vmatpush1.bf16.xpose.msra.mxu0 0
      %1673 = vmatprep.subr.bf16.mxu0 0
      %1674 = vmatpush1.bf16.xpose.msra.mxu0 0
      %1675 = vmatprep.subr.bf16.mxu0 0
      %1676 = vmatpush1.bf16.xpose.msra.mxu0 0
      %1677 = vmatprep.subr.bf16.mxu0 0
      %1678 = vmatpush1.bf16.xpose.msra.mxu0 0
      %1679 = vmatprep.subr.bf16.mxu0 0
      %1680 = vmatpush1.bf16.xpose.msra.mxu0 0
      %1681 = vmatprep.subr.bf16.mxu0 0
      %1682 = vmatpush1.bf16.xpose.msra.mxu0 0
      %1683 = vmatprep.subr.bf16.mxu0 0
      %1684 = vmatpush1.bf16.xpose.msra.mxu0 0
      %1685 = vmatprep.subr.bf16.mxu0 0
      %1686 = vmatpush1.bf16.xpose.msra.mxu0 0
      %1687 = vmatprep.subr.bf16.mxu0 0
      %1688 = vmatpush1.bf16.xpose.msra.mxu0 0
      %1689 = vmatprep.mubr.bf16.mxu0 0
      %1690 = vmatmul.mubr.bf16.gmra.mrb[0].mxu0 %v1652
      %v1691 = vpop.f32.mrb[0].mxu0
      %v1692 = vadd.f32 0.0, %v1691
      %v1693 = vpop.f32.mrb[0].mxu0
      %v1694 = vpop.f32.mrb[0].mxu0
      %v1695 = vadd.f32 0.0, %v1694
      %v1696 = vpop.f32.mrb[0].mxu0
      %1697 = vdwg.mxu0
      %v1698 = vsel %vm485, %v1692, -inf
      %1699 = vmax.xlane.f32.xlu0 %v1698
      %v1700 = vpop.xlane.xlu0 %1699
      %v1701 = vsel %vm485, %v1695, -inf
      %1702 = vmax.xlane.f32.xlu0 %v1701
      %v1703 = vpop.xlane.xlu0 %1702
      %v1704 = vsub.f32 %v1692, %v1700
      %v1705 = vsub.f32 %v1695, %v1703
      %v1706 = vmul.f32 %v1704, 1.442695
      %v1707 = vpow.pop %v1706
      %v1708 = vmul.f32 %v1705, 1.442695
      %v1709 = vpow.pop %v1708
      %v1710 = vsel %vm485, %v1707, 0.0
      %1711 = vadd.xlane.f32.xlu0 %v1710
      %v1712 = vpop.xlane.xlu0 %1711
      %v1713 = vsel %vm485, %v1709, 0.0
      %1714 = vadd.xlane.f32.xlu0 %v1713
      %v1715 = vpop.xlane.xlu0 %1714
      %v1716 = vrcp.pop %v1712
      %v1717 = vrcp.pop %v1715
      %v1718 = vmul.f32 %v1707, %v1716
      %v1719 = vmul.f32 %v1709, %v1717
      %v1720 = vpack.c.bf16 %v1719, %v1718
      %1721 = vrot.lane.b32.xlu0 %v1284, 40
      %v1722 = vpop.permute.xlu0 %1721
      %v1725 = vsel %vm485, %v1720, 0
      %1727 = vmatprep.subr.bf16.mxu0 0
      %1728 = vmatpush1.bf16.msra.mxu0 %v1722
      %1729 = vmatprep.subr.bf16.mxu0 0
      %1730 = vmatpush1.bf16.msra.mxu0 0
      %1731 = vmatprep.subr.bf16.mxu0 0
      %1732 = vmatpush1.bf16.msra.mxu0 0
      %1733 = vmatprep.subr.bf16.mxu0 0
      %1734 = vmatpush1.bf16.msra.mxu0 0
      %1735 = vmatprep.subr.bf16.mxu0 0
      %1736 = vmatpush1.bf16.msra.mxu0 0
      %1737 = vmatprep.subr.bf16.mxu0 0
      %1738 = vmatpush1.bf16.msra.mxu0 0
      %1739 = vmatprep.subr.bf16.mxu0 0
      %1740 = vmatpush1.bf16.msra.mxu0 0
      %1741 = vmatprep.subr.bf16.mxu0 0
      %1742 = vmatpush1.bf16.msra.mxu0 0
      %1743 = vmatprep.subr.bf16.mxu0 0
      %1744 = vmatpush1.bf16.msra.mxu0 0
      %1745 = vmatprep.subr.bf16.mxu0 0
      %1746 = vmatpush1.bf16.msra.mxu0 0
      %1747 = vmatprep.subr.bf16.mxu0 0
      %1748 = vmatpush1.bf16.msra.mxu0 0
      %1749 = vmatprep.subr.bf16.mxu0 0
      %1750 = vmatpush1.bf16.msra.mxu0 0
      %1751 = vmatprep.subr.bf16.mxu0 0
      %1752 = vmatpush1.bf16.msra.mxu0 0
      %1753 = vmatprep.subr.bf16.mxu0 0
      %1754 = vmatpush1.bf16.msra.mxu0 0
      %1755 = vmatprep.subr.bf16.mxu0 0
      %1756 = vmatpush1.bf16.msra.mxu0 0
      %1757 = vmatprep.subr.bf16.mxu0 0
      %1758 = vmatpush1.bf16.msra.mxu0 0
      %1759 = vmatprep.mubr.bf16.mxu0 0
      %1760 = vmatmul.mubr.bf16.gmra.mrb[0].mxu0 %v1725
      %v1761 = vpop.f32.mrb[0].mxu0
      %v1762 = vadd.f32 0.0, %v1761
      %v1763 = vpop.f32.mrb[0].mxu0
      %v1764 = vpop.f32.mrb[0].mxu0
      %v1765 = vadd.f32 0.0, %v1764
      %v1766 = vpop.f32.mrb[0].mxu0
      %1767 = vdwg.mxu0
      %1770 = vrot.lane.b32.xlu0 %v1520, 8
      %v1771 = vpop.permute.xlu0 %1770
      %1772 = vrot.lane.b32.xlu0 %v1523, 8
      %v1773 = vpop.permute.xlu0 %1772
      %1778 = vrot.lane.b32.xlu0 %v1641, 16
      %v1779 = vpop.permute.xlu0 %1778
      %1780 = vrot.lane.b32.xlu0 %v1644, 16
      %v1781 = vpop.permute.xlu0 %1780
      %1786 = vrot.lane.b32.xlu0 %v1762, 24
      %v1787 = vpop.permute.xlu0 %1786
      %1788 = vrot.lane.b32.xlu0 %v1765, 24
      %v1789 = vpop.permute.xlu0 %1788
      %v1792 = vsel %vm437, %v1399, %v1771
      %v1793 = vsel %vm437, %v1402, %v1773
      %v1794 = vsel %vm485, %v1792, %v1779
      %v1795 = vsel %vm485, %v1793, %v1781
      %v1796 = vsel %vm947, %v1794, %v1787
      %v1797 = vsel %vm947, %v1795, %v1789
      %s1798 = scalar_lea.vmem %s3, 32
      %v1799 = vld [vmem:[%s1798] sm:$0xff]
      %v1800 = vld [vmem:[%s1798 + $0x8] sm:$0xff]
      %v1801 = vld [vmem:[%s1798 + $0x10] sm:$0xff]
      %v1802 = vld [vmem:[%s1798 + $0x18] sm:$0xff]
      %v1803 = vpack.c.bf16 %v1797, %v1796
      %v1804 = vpack.c.bf16 %v1800, %v1799
      %v1805 = vpack.c.bf16 %v1802, %v1801
      %s1806 = scalar_lea.vmem %s4, 1
      %v1807 = vld [vmem:[%s1806] sm:$0x1]
      %v1809 = vlaneseq
      %v1810 = vshrl.u32 %v1809, 7
      %v1811 = vsub.s32 0, %v1810
      %v1812 = vrot.slane %v1807, %v1811
      %v1815 = vsel %vm388, %v1803, 0
      %1817 = vmatprep.subr.bf16.mxu0 0
      %1818 = vmatpush1.bf16.msra.mxu0 %v1804
      %1819 = vmatprep.subr.bf16.mxu0 0
      %1820 = vmatpush1.bf16.msra.mxu0 %v1805
      %1821 = vmatprep.subr.bf16.mxu0 0
      %1822 = vmatpush1.bf16.msra.mxu0 0
      %1823 = vmatprep.subr.bf16.mxu0 0
      %1824 = vmatpush1.bf16.msra.mxu0 0
      %1825 = vmatprep.subr.bf16.mxu0 0
      %1826 = vmatpush1.bf16.msra.mxu0 0
      %1827 = vmatprep.subr.bf16.mxu0 0
      %1828 = vmatpush1.bf16.msra.mxu0 0
      %1829 = vmatprep.subr.bf16.mxu0 0
      %1830 = vmatpush1.bf16.msra.mxu0 0
      %1831 = vmatprep.subr.bf16.mxu0 0
      %1832 = vmatpush1.bf16.msra.mxu0 0
      %1833 = vmatprep.subr.bf16.mxu0 0
      %1834 = vmatpush1.bf16.msra.mxu0 0
      %1835 = vmatprep.subr.bf16.mxu0 0
      %1836 = vmatpush1.bf16.msra.mxu0 0
      %1837 = vmatprep.subr.bf16.mxu0 0
      %1838 = vmatpush1.bf16.msra.mxu0 0
      %1839 = vmatprep.subr.bf16.mxu0 0
      %1840 = vmatpush1.bf16.msra.mxu0 0
      %1841 = vmatprep.subr.bf16.mxu0 0
      %1842 = vmatpush1.bf16.msra.mxu0 0
      %1843 = vmatprep.subr.bf16.mxu0 0
      %1844 = vmatpush1.bf16.msra.mxu0 0
      %1845 = vmatprep.subr.bf16.mxu0 0
      %1846 = vmatpush1.bf16.msra.mxu0 0
      %1847 = vmatprep.subr.bf16.mxu0 0
      %1848 = vmatpush1.bf16.msra.mxu0 0
      %1849 = vmatprep.mubr.bf16.mxu0 0
      %1850 = vmatmul.mubr.bf16.gmra.mrb[0].mxu0 %v1815
      %v1851 = vpop.f32.mrb[0].mxu0
      %v1852 = vadd.f32 %v1812, %v1851
      %v1853 = vpop.f32.mrb[0].mxu0
      %v1854 = vpop.f32.mrb[0].mxu0
      %v1855 = vadd.f32 %v1812, %v1854
      %v1856 = vpop.f32.mrb[0].mxu0
      %1857 = vdwg.mxu0
      %v1858 = vadd.f32 %v1222, %v1852
      %v1859 = vadd.f32 %v1223, %v1855
      %v1860 = vlaneseq
      %v1861 = vshrl.u32 %v1860, 7
      %v1862 = vsub.s32 0, %v1861
      %v1863 = vrot.slane %v1858, %v1862
      %v1864 = vlaneseq
      %v1865 = vshrl.u32 %v1864, 7
      %v1866 = vsub.s32 7, %v1865
      %v1867 = vrot.slane %v1859, %v1866
      %v1868 = vrot.slane %v1858, 7
      %v1869 = vrot.slane %v1859, 7
      %v1870 = vsel %vm1023, %v1868, %v1869
      %v1871 = vsel %vm1023, %v1869, %v1868
      %v1872 = vsel %vm1023, %v1863, %v1871
      %v1873 = vsel %vm1026, %v1863, %v1870
      %v1874 = vrot.slane %v1858, 1
      %v1875 = vrot.slane %v1859, 1
      %v1876 = vsel %vm1031, %v1874, %v1875
      %v1877 = vsel %vm1031, %v1875, %v1874
      %v1878 = vsel %vm1034, %v1867, %v1876
      %v1879 = vsel %vm1035, %v1867, %v1877
      %v1880 = vadd.f32 %v1858, %v1872
      %v1881 = vadd.f32 %v1859, %v1873
      %v1882 = vadd.f32 %v1880, %v1878
      %v1883 = vadd.f32 %v1881, %v1879
      %v1884 = vrot.slane %v1858, 6
      %v1885 = vrot.slane %v1859, 6
      %v1886 = vsel %vm1044, %v1884, %v1885
      %v1887 = vsel %vm1044, %v1885, %v1884
      %v1888 = vsel %vm1044, %v1863, %v1887
      %v1889 = vsel %vm1047, %v1863, %v1886
      %v1890 = vrot.slane %v1858, 2
      %v1891 = vrot.slane %v1859, 2
      %v1892 = vsel %vm1052, %v1890, %v1891
      %v1893 = vsel %vm1052, %v1891, %v1890
      %v1894 = vsel %vm1055, %v1867, %v1892
      %v1895 = vsel %vm1056, %v1867, %v1893
      %v1896 = vadd.f32 %v1882, %v1888
      %v1897 = vadd.f32 %v1883, %v1889
      %v1898 = vadd.f32 %v1896, %v1894
      %v1899 = vadd.f32 %v1897, %v1895
      %v1900 = vmul.f32 %v1898, 0.2
      %v1901 = vmul.f32 %v1899, 0.2
      %v1902 = vsub.f32 %v1858, %v1900
      %v1903 = vsub.f32 %v1859, %v1901
      %s1904 = scalar_lea.vmem %s5, 32
      %v1905 = vld [vmem:[%s1904] sm:$0xff]
      %v1906 = vld [vmem:[%s1904 + $0x8] sm:$0xff]
      %v1907 = vld [vmem:[%s1904 + $0x10] sm:$0xff]
      %v1908 = vld [vmem:[%s1904 + $0x18] sm:$0xff]
      %v1909 = vpack.c.bf16 %v1903, %v1902
      %v1910 = vpack.c.bf16 %v1906, %v1905
      %v1911 = vpack.c.bf16 %v1908, %v1907
      %v1913 = vsel %vm388, %v1909, 0
      %1915 = vmatprep.subr.bf16.mxu0 0
      %1916 = vmatpush1.bf16.msra.mxu0 %v1910
      %1917 = vmatprep.subr.bf16.mxu0 0
      %1918 = vmatpush1.bf16.msra.mxu0 %v1911
      %1919 = vmatprep.subr.bf16.mxu0 0
      %1920 = vmatpush1.bf16.msra.mxu0 0
      %1921 = vmatprep.subr.bf16.mxu0 0
      %1922 = vmatpush1.bf16.msra.mxu0 0
      %1923 = vmatprep.subr.bf16.mxu0 0
      %1924 = vmatpush1.bf16.msra.mxu0 0
      %1925 = vmatprep.subr.bf16.mxu0 0
      %1926 = vmatpush1.bf16.msra.mxu0 0
      %1927 = vmatprep.subr.bf16.mxu0 0
      %1928 = vmatpush1.bf16.msra.mxu0 0
      %1929 = vmatprep.subr.bf16.mxu0 0
      %1930 = vmatpush1.bf16.msra.mxu0 0
      %1931 = vmatprep.subr.bf16.mxu0 0
      %1932 = vmatpush1.bf16.msra.mxu0 0
      %1933 = vmatprep.subr.bf16.mxu0 0
      %1934 = vmatpush1.bf16.msra.mxu0 0
      %1935 = vmatprep.subr.bf16.mxu0 0
      %1936 = vmatpush1.bf16.msra.mxu0 0
      %1937 = vmatprep.subr.bf16.mxu0 0
      %1938 = vmatpush1.bf16.msra.mxu0 0
      %1939 = vmatprep.subr.bf16.mxu0 0
      %1940 = vmatpush1.bf16.msra.mxu0 0
      %1941 = vmatprep.subr.bf16.mxu0 0
      %1942 = vmatpush1.bf16.msra.mxu0 0
      %1943 = vmatprep.subr.bf16.mxu0 0
      %1944 = vmatpush1.bf16.msra.mxu0 0
      %1945 = vmatprep.subr.bf16.mxu0 0
      %1946 = vmatpush1.bf16.msra.mxu0 0
      %1947 = vmatprep.mubr.bf16.mxu0 0
      %1948 = vmatmul.mubr.bf16.gmra.mrb[0].mxu0 %v1913
      %v1949 = vpop.f32.mrb[0].mxu0
      %v1950 = vadd.f32 0.0, %v1949
      %v1951 = vpop.f32.mrb[0].mxu0
      %v1952 = vpop.f32.mrb[0].mxu0
      %v1953 = vadd.f32 0.0, %v1952
      %v1954 = vpop.f32.mrb[0].mxu0
      %1955 = vdwg.mxu0
      %v1956 = vmax.f32 %v1950, 0.0
      %v1957 = vmax.f32 %v1953, 0.0
      %s1958 = scalar_lea.vmem %s6, 64
      %v1959 = vld [vmem:[%s1958] sm:$0xff]
      %v1960 = vld [vmem:[%s1958 + $0x8] sm:$0xff]
      %v1961 = vld [vmem:[%s1958 + $0x10] sm:$0xff]
      %v1962 = vld [vmem:[%s1958 + $0x18] sm:$0xff]
      %v1963 = vld [vmem:[%s1958 + $0x20] sm:$0xff]
      %v1964 = vld [vmem:[%s1958 + $0x28] sm:$0xff]
      %v1965 = vld [vmem:[%s1958 + $0x30] sm:$0xff]
      %v1966 = vld [vmem:[%s1958 + $0x38] sm:$0xff]
      %v1967 = vpack.c.bf16 %v1957, %v1956
      %v1968 = vpack.c.bf16 %v1960, %v1959
      %v1969 = vpack.c.bf16 %v1962, %v1961
      %v1970 = vpack.c.bf16 %v1964, %v1963
      %v1971 = vpack.c.bf16 %v1966, %v1965
      %v1973 = vsel %vm1133, %v1967, 0
      %1975 = vmatprep.subr.bf16.mxu0 0
      %1976 = vmatpush1.bf16.msra.mxu0 %v1968
      %1977 = vmatprep.subr.bf16.mxu0 0
      %1978 = vmatpush1.bf16.msra.mxu0 %v1969
      %1979 = vmatprep.subr.bf16.mxu0 0
      %1980 = vmatpush1.bf16.msra.mxu0 %v1970
      %1981 = vmatprep.subr.bf16.mxu0 0
      %1982 = vmatpush1.bf16.msra.mxu0 %v1971
      %1983 = vmatprep.subr.bf16.mxu0 0
      %1984 = vmatpush1.bf16.msra.mxu0 0
      %1985 = vmatprep.subr.bf16.mxu0 0
      %1986 = vmatpush1.bf16.msra.mxu0 0
      %1987 = vmatprep.subr.bf16.mxu0 0
      %1988 = vmatpush1.bf16.msra.mxu0 0
      %1989 = vmatprep.subr.bf16.mxu0 0
      %1990 = vmatpush1.bf16.msra.mxu0 0
      %1991 = vmatprep.subr.bf16.mxu0 0
      %1992 = vmatpush1.bf16.msra.mxu0 0
      %1993 = vmatprep.subr.bf16.mxu0 0
      %1994 = vmatpush1.bf16.msra.mxu0 0
      %1995 = vmatprep.subr.bf16.mxu0 0
      %1996 = vmatpush1.bf16.msra.mxu0 0
      %1997 = vmatprep.subr.bf16.mxu0 0
      %1998 = vmatpush1.bf16.msra.mxu0 0
      %1999 = vmatprep.subr.bf16.mxu0 0
      %2000 = vmatpush1.bf16.msra.mxu0 0
      %2001 = vmatprep.subr.bf16.mxu0 0
      %2002 = vmatpush1.bf16.msra.mxu0 0
      %2003 = vmatprep.subr.bf16.mxu0 0
      %2004 = vmatpush1.bf16.msra.mxu0 0
      %2005 = vmatprep.subr.bf16.mxu0 0
      %2006 = vmatpush1.bf16.msra.mxu0 0
      %2007 = vmatprep.mubr.bf16.mxu0 0
      %2008 = vmatmul.mubr.bf16.gmra.mrb[0].mxu0 %v1973
      %v2009 = vpop.f32.mrb[0].mxu0
      %v2010 = vadd.f32 0.0, %v2009
      %v2011 = vpop.f32.mrb[0].mxu0
      %v2012 = vpop.f32.mrb[0].mxu0
      %v2013 = vadd.f32 0.0, %v2012
      %v2014 = vpop.f32.mrb[0].mxu0
      %2015 = vdwg.mxu0
      %v2016 = vadd.f32 %v1902, %v2010
      %v2017 = vadd.f32 %v1903, %v2013
      %v2018 = vlaneseq
      %v2019 = vshrl.u32 %v2018, 7
      %v2020 = vsub.s32 0, %v2019
      %v2021 = vrot.slane %v2016, %v2020
      %v2022 = vlaneseq
      %v2023 = vshrl.u32 %v2022, 7
      %v2024 = vsub.s32 7, %v2023
      %v2025 = vrot.slane %v2017, %v2024
      %v2026 = vrot.slane %v2016, 7
      %v2027 = vrot.slane %v2017, 7
      %v2028 = vsel %vm1023, %v2026, %v2027
      %v2029 = vsel %vm1023, %v2027, %v2026
      %v2030 = vsel %vm1023, %v2021, %v2029
      %v2031 = vsel %vm1026, %v2021, %v2028
      %v2032 = vrot.slane %v2016, 1
      %v2033 = vrot.slane %v2017, 1
      %v2034 = vsel %vm1031, %v2032, %v2033
      %v2035 = vsel %vm1031, %v2033, %v2032
      %v2036 = vsel %vm1034, %v2025, %v2034
      %v2037 = vsel %vm1035, %v2025, %v2035
      %v2038 = vadd.f32 %v2016, %v2030
      %v2039 = vadd.f32 %v2017, %v2031
      %v2040 = vadd.f32 %v2038, %v2036
      %v2041 = vadd.f32 %v2039, %v2037
      %v2042 = vrot.slane %v2016, 6
      %v2043 = vrot.slane %v2017, 6
      %v2044 = vsel %vm1044, %v2042, %v2043
      %v2045 = vsel %vm1044, %v2043, %v2042
      %v2046 = vsel %vm1044, %v2021, %v2045
      %v2047 = vsel %vm1047, %v2021, %v2044
      %v2048 = vrot.slane %v2016, 2
      %v2049 = vrot.slane %v2017, 2
      %v2050 = vsel %vm1052, %v2048, %v2049
      %v2051 = vsel %vm1052, %v2049, %v2048
      %v2052 = vsel %vm1055, %v2025, %v2050
      %v2053 = vsel %vm1056, %v2025, %v2051
      %v2054 = vadd.f32 %v2040, %v2046
      %v2055 = vadd.f32 %v2041, %v2047
      %v2056 = vadd.f32 %v2054, %v2052
      %v2057 = vadd.f32 %v2055, %v2053
      %v2058 = vmul.f32 %v2056, 0.2
      %v2059 = vmul.f32 %v2057, 0.2
      %v2060 = vsub.f32 %v2016, %v2058
      %v2061 = vsub.f32 %v2017, %v2059
      %v2062 = vsel %vm388, %v2060, 0.0
      %2063 = vadd.xlane.f32.xlu0 %v2062
      %v2064 = vpop.xlane.xlu0 %2063
      %v2065 = vsel %vm388, %v2061, 0.0
      %2066 = vadd.xlane.f32.xlu0 %v2065
      %v2067 = vpop.xlane.xlu0 %2066
      %v2068 = vrcp.pop 32.0
      %v2069 = vmul.f32 %v2064, %v2068
      %v2070 = vmul.f32 %v2067, %v2068
      %v2071 = vsub.f32 %v2060, %v2069
      %v2072 = vsub.f32 %v2061, %v2070
      %v2073 = vmul.f32 %v2071, %v2071
      %v2074 = vmul.f32 %v2072, %v2072
      %v2075 = vsel %vm388, %v2073, 0.0
      %2076 = vadd.xlane.f32.xlu0 %v2075
      %v2077 = vpop.xlane.xlu0 %2076
      %v2078 = vsel %vm388, %v2074, 0.0
      %2079 = vadd.xlane.f32.xlu0 %v2078
      %v2080 = vpop.xlane.xlu0 %2079
      %v2081 = vmul.f32 %v2077, %v2068
      %v2082 = vmul.f32 %v2080, %v2068
      %v2083 = vadd.f32 %v2081, 1e-05
      %v2084 = vadd.f32 %v2082, 1e-05
      %v2085 = vrsqrt.pop %v2083
      %v2086 = vrsqrt.pop %v2084
      %v2087 = vmul.f32 %v2071, %v2085
      %v2088 = vmul.f32 %v2072, %v2086
      %v2089 = vld [vmem:[%s7] sm:$0x1]
      %v2091 = vlaneseq
      %v2092 = vshrl.u32 %v2091, 7
      %v2093 = vsub.s32 0, %v2092
      %v2094 = vrot.slane %v2089, %v2093
      %v2096 = vmul.f32 %v2087, %v2094
      %v2097 = vmul.f32 %v2088, %v2094
      %v2098 = vld [vmem:[%s8] sm:$0x1]
      %v2100 = vlaneseq
      %v2101 = vshrl.u32 %v2100, 7
      %v2102 = vsub.s32 0, %v2101
      %v2103 = vrot.slane %v2098, %v2102
      %v2105 = vadd.f32 %v2096, %v2103
      %v2106 = vadd.f32 %v2097, %v2103
      %v2107 = vsel %vm388, %v2105, 0.0
      %v2108 = vsel %vm388, %v2106, 0.0
      %v2109 = vadd.f32 %v2107, %v2108
      %v2110 = vrot.slane %v2109, 4
      %v2111 = vadd.f32 %v2109, %v2110
      %v2112 = vrot.slane %v2111, 2
      %v2113 = vadd.f32 %v2111, %v2112
      %v2114 = vrot.slane %v2113, 1
      %v2115 = vadd.f32 %v2113, %v2114
      %v2116 = vrcp.pop 16.0
      %v2117 = vmul.f32 %v2115, %v2116
      %v2118 = vsub.f32 %v2105, %v2117
      %v2119 = vsub.f32 %v2106, %v2117
      %v2121 = vrot.slane %v2118, 4
      %2122 = vrot.lane.b32.xlu0 %v2121, 32
      %v2123 = vpop.permute.xlu0 %2122
      %2126 = vrot.lane.b32.xlu0 %v2119, 64
      %v2127 = vpop.permute.xlu0 %2126
      %v2129 = vrot.slane %v2119, 4
      %2130 = vrot.lane.b32.xlu0 %v2129, 96
      %v2131 = vpop.permute.xlu0 %2130
      %v2133 = vsel %vm388, %v2118, %v2123
      %v2134 = vsel %vm1133, %v2133, %v2127
      %vm2135 = vcmask 785408
      %v2136 = vsel %vm2135, %v2134, %v2131
      %2137 = vst [vmem:[%s365] sm:$0xf] %v2136
      %2140 = vrot.lane.b32.xlu0 %v627, 16
      %v2141 = vpop.permute.xlu0 %2140
      %2142 = vrot.lane.b32.xlu0 %v628, 16
      %v2143 = vpop.permute.xlu0 %2142
      %2148 = vrot.lane.b32.xlu0 %v748, 32
      %v2149 = vpop.permute.xlu0 %2148
      %2150 = vrot.lane.b32.xlu0 %v749, 32
      %v2151 = vpop.permute.xlu0 %2150
      %2156 = vrot.lane.b32.xlu0 %v869, 48
      %v2157 = vpop.permute.xlu0 %2156
      %2158 = vrot.lane.b32.xlu0 %v870, 48
      %v2159 = vpop.permute.xlu0 %2158
      %2164 = vrot.lane.b32.xlu0 %v1355, 64
      %v2165 = vpop.permute.xlu0 %2164
      %2166 = vrot.lane.b32.xlu0 %v1356, 64
      %v2167 = vpop.permute.xlu0 %2166
      %2172 = vrot.lane.b32.xlu0 %v1476, 80
      %v2173 = vpop.permute.xlu0 %2172
      %2174 = vrot.lane.b32.xlu0 %v1477, 80
      %v2175 = vpop.permute.xlu0 %2174
      %2180 = vrot.lane.b32.xlu0 %v1597, 96
      %v2181 = vpop.permute.xlu0 %2180
      %2182 = vrot.lane.b32.xlu0 %v1598, 96
      %v2183 = vpop.permute.xlu0 %2182
      %2188 = vrot.lane.b32.xlu0 %v1718, 112
      %v2189 = vpop.permute.xlu0 %2188
      %2190 = vrot.lane.b32.xlu0 %v1719, 112
      %v2191 = vpop.permute.xlu0 %2190
      %v2194 = vsel %vm485, %v506, %v2141
      %v2195 = vsel %vm485, %v507, %v2143
      %v2196 = vsel %vm388, %v2194, %v2149
      %v2197 = vsel %vm388, %v2195, %v2151
      %vm2198 = vcmask 392192
      %v2199 = vsel %vm2198, %v2196, %v2157
      %v2200 = vsel %vm2198, %v2197, %v2159
      %v2201 = vsel %vm1133, %v2199, %v2165
      %v2202 = vsel %vm1133, %v2200, %v2167
      %vm2203 = vcmask 654336
      %v2204 = vsel %vm2203, %v2201, %v2173
      %v2205 = vsel %vm2203, %v2202, %v2175
      %v2206 = vsel %vm2135, %v2204, %v2181
      %v2207 = vsel %vm2135, %v2205, %v2183
      %vm2208 = vcmask 916480
      %v2209 = vsel %vm2208, %v2206, %v2189
      %v2210 = vsel %vm2208, %v2207, %v2191
      %2211 = vst [vmem:[%s370] sm:$0xff] %v2209
      %2212 = vst [vmem:[%s370 + $0x8] sm:$0xff] %v2210
      %p2213 = scmp.lt.s32.totalorder %s22, 1
      %s2214 = scalar_select %p2213, %s22, 1
      %s2215 = smul.addr %s2214, 4
      %s2216 = scalar_lea.vmem %s9, %s2215
      %p2217 = scmp.lt.s32.totalorder %s22, 1
      %s2218 = scalar_select %p2217, %s22, 1
      %s2219 = smul.addr %s2218, 2
      %s2220 = smul.addr %s2219, 8
      %s2221 = scalar_lea.vmem %s10, %s2220
      // Predicated region
      $region57: #{encoder_forward.1} parent=55 // pred_check
        %p2222 = pneg %p234
      $region58: #{encoder_forward.1} parent=55 // pred_check_branch
        %2224 = sbr.rel (%p2222) target = $region60
      $region59: #{encoder_forward.1} parent=55 // pred_region
        _
      $region60: #{encoder_forward.1} parent=55 // pred_fallthru
        _
      // Predicated region
      $region61: #{encoder_forward.1} parent=55 // pred_check
        %p2225 = pneg %p260
      $region62: #{encoder_forward.1} parent=55 // pred_check_branch
        %2227 = sbr.rel (%p2225) target = $region64
      $region63: #{encoder_forward.1} parent=55 // pred_region
        _
      $region64: #{encoder_forward.1} parent=55 // pred_fallthru
        _
    $region56: #{encoder_forward.1} parent=5 // pred_fallthru
      _
    %p2228 = scmp.le.s32.totalorder 2, %s17
    // Predicated region
    $region65: #{encoder_forward.1} parent=5 // pred_check
      %p2229 = pneg %p2228
    $region66: #{encoder_forward.1} parent=5 // pred_check_branch
      %2231 = sbr.rel (%p2229) target = $region68
    $region67: #{encoder_forward.1} parent=5 // pred_region
      %s2232 = ssub.s32 %s17, 2
      // Predicated region
      $region69: #{encoder_forward.1} parent=67 // pred_check
        %p2233 = pneg %p240
      $region70: #{encoder_forward.1} parent=67 // pred_check_branch
        %2235 = sbr.rel (%p2233) target = $region72
      $region71: #{encoder_forward.1} parent=67 // pred_region
        %p2236 = scmp.lt.s32.totalorder %s23, 1
        %s2237 = scalar_select %p2236, %s23, 1
        %s2238 = smul.addr %s2237, 4
        %s2239 = scalar_lea.vmem %s9, %s2238
      $region72: #{encoder_forward.1} parent=67 // pred_fallthru
        _
      // Predicated region
      $region73: #{encoder_forward.1} parent=67 // pred_check
        %p2240 = pneg %p266
      $region74: #{encoder_forward.1} parent=67 // pred_check_branch
        %2242 = sbr.rel (%p2240) target = $region76
      $region75: #{encoder_forward.1} parent=67 // pred_region
        %p2243 = scmp.lt.s32.totalorder %s23, 1
        %s2244 = scalar_select %p2243, %s23, 1
        %s2245 = smul.addr %s2244, 2
        %s2246 = smul.addr %s2245, 8
        %s2247 = scalar_lea.vmem %s10, %s2246
      $region76: #{encoder_forward.1} parent=67 // pred_fallthru
        _
    $region68: #{encoder_forward.1} parent=5 // pred_fallthru
      _
  $region6: #{encoder_forward.1} parent=0 // loop_footer
    %s21 = sadd.s32 1, %s17
  $region7: #{encoder_forward.1} parent=0 // loop_footer_branch
    %16 = sbr.rel target = $region3
  $region8: #{encoder_forward.1} parent=0 // loop_exit
    _

</llo_original>
